<compile_context>
chip_gen: v5e
topology: v5e:2x2
jax: 0.10.0
libtpu: 0.0.40
codegen_flags: <defaults>
</compile_context>

<pallas_src>
import jax
import jax.numpy as jnp
from jax.experimental import pallas as pl
from jax.experimental.pallas import tpu as pltpu


def lstm_kernel(x_ref,                         # (T*B, I)  bf16, time-major flattened
                w_ih0_ref, w_hh0_ref, b0_ref,  # (I,4H) bf16, (H,4H) bf16, (1,4H) f32
                w_ih1_ref, w_hh1_ref, b1_ref,  # (H,4H) bf16, (H,4H) bf16, (1,4H) f32
                fc_w_ref, fc_b_ref,            # (1,H) f32, (1,1) f32
                out_ref):                      # (B, 1) f32
    B = out_ref.shape[0]
    TB = x_ref.shape[0]
    T = TB // B
    H = w_hh0_ref.shape[0]

    w_hh0 = w_hh0_ref[...]
    w_ih1 = w_ih1_ref[...]
    w_hh1 = w_hh1_ref[...]
    b1 = b1_ref[...]

    def cell(gates, c):
        """LSTM cell elementwise math. Gate columns are [i | f | o | g] so one
        sigmoid pass (lanes 0:3H) and one tanh pass (lanes 3H:4H) suffice.
        All math in f32 (v5e VPU/EUP have no bf16 path)."""
        sig = jax.nn.sigmoid(gates[:, 0:3 * H])          # [i, f, o] in one EUP launch
        g = jnp.tanh(gates[:, 3 * H:4 * H])              # g in one EUP launch
        c_new = sig[:, H:2 * H] * c + sig[:, 0:H] * g
        h_new = sig[:, 2 * H:3 * H] * jnp.tanh(c_new)
        return h_new, c_new
    # TODO(synk): lane-band / sublane-blocked gate layout would remove ~3 XLU rotates
    # per step (small win, after the structural changes).

    # ---- layer 0: hoisted input projection, single (T*B,I)@(I,4H) MXU push ----
    xproj0 = jnp.dot(x_ref[...], w_ih0_ref[...],
                     preferred_element_type=jnp.float32) + b0_ref[...]   # (T*B, 4H) f32

    zeros = jnp.zeros((B, H), jnp.float32)
    h0, c0 = zeros, zeros
    h1, c1 = zeros, zeros
    h0_prev = None   # bf16 layer-0 output of the previous step; layer-1's input

    def layer1_step(x_in_bf16, h1, c1):
        gates1 = (jnp.dot(x_in_bf16, w_ih1, preferred_element_type=jnp.float32)
                  + jnp.dot(h1.astype(jnp.bfloat16), w_hh1,
                            preferred_element_type=jnp.float32)
                  + b1)
        return cell(gates1, c1)

    # ---- wavefront: iteration t does layer-0 step t and layer-1 step t-1 ----
    for t in range(T):   # T=8 static -> fully unrolled
        gates0 = xproj0[t * B:(t + 1) * B, :] + jnp.dot(
            h0.astype(jnp.bfloat16), w_hh0, preferred_element_type=jnp.float32)
        h0, c0 = cell(gates0, c0)

        if h0_prev is not None:
            # independent of layer-0 step t -> hides under its MXU/EUP latency
            h1, c1 = layer1_step(h0_prev, h1, c1)

        h0_prev = h0.astype(jnp.bfloat16)

    # ---- epilogue: layer-1 step T-1 ----
    h1, c1 = layer1_step(h0_prev, h1, c1)

    # TODO(synk): nn.LSTM inter-layer dropout is train-mode only; inference semantics here.

    # ---- fc (O=1) + sigmoid: VPU multiply + lane reduction (no 1-column MXU push) ----
    logits = jnp.sum(h1 * fc_w_ref[...], axis=-1, keepdims=True) + fc_b_ref[...]
    out_ref[...] = jax.nn.sigmoid(logits)


@jax.jit
def lstm_forward(x, w_ih0_t, w_hh0_t, b0, w_ih1_t, w_hh1_t, b1, fc_w, fc_b):
    """x: (B, T, I) batch-first float32, like PyTorch nn.LSTM(batch_first=True)."""
    B, T, I = x.shape
    O = fc_w.shape[0]
    # time-major + flatten so per-step access is an aligned sublane slice;
    # cast to bf16 here since x only feeds the MXU.
    x_tm = jnp.transpose(x, (1, 0, 2)).reshape(T * B, I).astype(jnp.bfloat16)

    vmem = pl.BlockSpec(memory_space=pltpu.MemorySpace.VMEM)
    return pl.pallas_call(
        lstm_kernel,
        out_shape=jax.ShapeDtypeStruct((B, O), jnp.float32),
        in_specs=[vmem] * 9,
        out_specs=vmem,
    )(x_tm, w_ih0_t, w_hh0_t, b0, w_ih1_t, w_hh1_t, b1, fc_w, fc_b)


def init_params(key, input_size, hidden_size, output_size):
    """PyTorch-style init U(-1/sqrt(H), 1/sqrt(H)), then kernel-layout glue:
    transpose to (in, 4H), permute gate columns [i,f,g,o] -> [i,f,o,g], cast MXU
    weights to bf16. Biases and fc stay f32 (VPU/EUP path)."""
    assert output_size == 1, "VPU-reduction head implemented for output_size == 1"
    H = hidden_size
    bound = 1.0 / (H ** 0.5)
    ks = jax.random.split(key, 12)
    u = lambda k, shape: jax.random.uniform(k, shape, jnp.float32, -bound, bound)

    # layer 0 (PyTorch shapes: w_ih (4H, I), w_hh (4H, H), biases (4H,))
    w_ih0 = u(ks[0], (4 * H, input_size))
    w_hh0 = u(ks[1], (4 * H, H))
    b0 = (u(ks[2], (4 * H,)) + u(ks[3], (4 * H,))).reshape(1, 4 * H)   # b_ih + b_hh folded
    # layer 1
    w_ih1 = u(ks[4], (4 * H, H))
    w_hh1 = u(ks[5], (4 * H, H))
    b1 = (u(ks[6], (4 * H,)) + u(ks[7], (4 * H,))).reshape(1, 4 * H)
    # fc: Linear(H, O)
    fc_w = u(ks[8], (output_size, H))
    fc_b = u(ks[9], (output_size,)).reshape(1, output_size)

    def perm_gates(w_t):  # columns [i | f | g | o] -> [i | f | o | g]
        return jnp.concatenate(
            [w_t[..., 0:H], w_t[..., H:2 * H], w_t[..., 3 * H:4 * H], w_t[..., 2 * H:3 * H]],
            axis=-1)

    kernel_params = (perm_gates(w_ih0.T).astype(jnp.bfloat16),
                     perm_gates(w_hh0.T).astype(jnp.bfloat16),
                     perm_gates(b0),
                     perm_gates(w_ih1.T).astype(jnp.bfloat16),
                     perm_gates(w_hh1.T).astype(jnp.bfloat16),
                     perm_gates(b1),
                     fc_w,   # (1, H) f32
                     fc_b)   # (1, 1) f32
    torch_params = (w_ih0, w_hh0, b0, w_ih1, w_hh1, b1, fc_w, fc_b)
    return kernel_params, torch_params


def lstm_reference(x, torch_params):
    """Pure-JAX f32 reference matching PyTorch LSTMModel.forward (eval mode)."""
    w_ih0, w_hh0, b0, w_ih1, w_hh1, b1, fc_w, fc_b = torch_params
    B, T, I = x.shape
    H = w_hh0.shape[1]

    def layer(inp, w_ih, w_hh, b):
        h = jnp.zeros((B, H), jnp.float32)
        c = jnp.zeros((B, H), jnp.float32)
        outs = []
        for t in range(T):
            gates = inp[:, t, :] @ w_ih.T + h @ w_hh.T + b   # PyTorch order [i,f,g,o]
            i_g = jax.nn.sigmoid(gates[:, 0:H])
            f_g = jax.nn.sigmoid(gates[:, H:2 * H])
            g_g = jnp.tanh(gates[:, 2 * H:3 * H])
            o_g = jax.nn.sigmoid(gates[:, 3 * H:4 * H])
            c = f_g * c + i_g * g_g
            h = o_g * jnp.tanh(c)
            outs.append(h)
        return jnp.stack(outs, axis=1)

    out0 = layer(x, w_ih0, w_hh0, b0)
    out1 = layer(out0, w_ih1, w_hh1, b1)
    logits = out1[:, -1, :] @ fc_w.T + fc_b
    return jax.nn.sigmoid(logits)


if __name__ == "__main__":
    B, T, I, H, L, O = 8, 8, 16, 32, 2, 1   # num_layers=2 baked into the kernel arg list

    key = jax.random.PRNGKey(0)
    kx, kp = jax.random.split(key)
    x = jax.random.normal(kx, (B, T, I), jnp.float32)
    kernel_params, torch_params = init_params(kp, I, H, O)

    out = lstm_forward(x, *kernel_params)
    jax.block_until_ready(out)
    assert out.shape == (B, O) and out.dtype == jnp.float32
    assert bool(jnp.all(jnp.isfinite(out)))

    # bf16 MXU operands -> loose tolerance vs. the f32 reference (review note).
    ref = lstm_reference(x, torch_params)
    assert bool(jnp.all(jnp.abs(out - ref) < 5e-2)), (out, ref)

    print("KERNEL_OK")
</pallas_src>

<mosaic_0001>
module attributes {stable_mosaic.version = 11 : i64} {
  func.func @lstm_kernel(%arg0: memref<64x16xbf16, #tpu.memory_space<vmem>>, %arg1: memref<16x128xbf16, #tpu.memory_space<vmem>>, %arg2: memref<32x128xbf16, #tpu.memory_space<vmem>>, %arg3: memref<1x128xf32, #tpu.memory_space<vmem>>, %arg4: memref<32x128xbf16, #tpu.memory_space<vmem>>, %arg5: memref<32x128xbf16, #tpu.memory_space<vmem>>, %arg6: memref<1x128xf32, #tpu.memory_space<vmem>>, %arg7: memref<1x32xf32, #tpu.memory_space<vmem>>, %arg8: memref<1x1xf32, #tpu.memory_space<vmem>>, %arg9: memref<8x1xf32, #tpu.memory_space<vmem>>) attributes {dimension_semantics = [], scalar_prefetch = 0 : i64, scratch_operands = 0 : i64, tpu.core_type = #tpu.core_type<tc>} {
    %c0 = arith.constant 0 : index
    %c0_0 = arith.constant 0 : index
    %0 = vector.load %arg2[%c0, %c0_0] : memref<32x128xbf16, #tpu.memory_space<vmem>>, vector<32x128xbf16>
    %c0_1 = arith.constant 0 : index
    %c0_2 = arith.constant 0 : index
    %1 = vector.load %arg4[%c0_1, %c0_2] : memref<32x128xbf16, #tpu.memory_space<vmem>>, vector<32x128xbf16>
    %c0_3 = arith.constant 0 : index
    %c0_4 = arith.constant 0 : index
    %2 = vector.load %arg5[%c0_3, %c0_4] : memref<32x128xbf16, #tpu.memory_space<vmem>>, vector<32x128xbf16>
    %c0_5 = arith.constant 0 : index
    %c0_6 = arith.constant 0 : index
    %3 = vector.load %arg6[%c0_5, %c0_6] : memref<1x128xf32, #tpu.memory_space<vmem>>, vector<1x128xf32>
    %c0_7 = arith.constant 0 : index
    %c0_8 = arith.constant 0 : index
    %4 = vector.load %arg0[%c0_7, %c0_8] : memref<64x16xbf16, #tpu.memory_space<vmem>>, vector<64x16xbf16>
    %c0_9 = arith.constant 0 : index
    %c0_10 = arith.constant 0 : index
    %5 = vector.load %arg1[%c0_9, %c0_10] : memref<16x128xbf16, #tpu.memory_space<vmem>>, vector<16x128xbf16>
    %cst = arith.constant dense<0.000000e+00> : vector<64x128xf32>
    %6 = tpu.matmul %4, %5, %cst {dimension_numbers = #tpu.dot_dimension_numbers<[1], [0], [0], [1], [0, 0, 1, 1], [], []>} : vector<64x16xbf16>, vector<16x128xbf16>, vector<64x128xf32> -> vector<64x128xf32>
    %c0_11 = arith.constant 0 : index
    %c0_12 = arith.constant 0 : index
    %7 = vector.load %arg3[%c0_11, %c0_12] : memref<1x128xf32, #tpu.memory_space<vmem>>, vector<1x128xf32>
    %8 = vector.broadcast %7 : vector<1x128xf32> to vector<64x128xf32>
    %9 = arith.addf %6, %8 : vector<64x128xf32>
    %cst_13 = arith.constant 0.000000e+00 : f32
    %10 = vector.broadcast %cst_13 : f32 to vector<8x32xf32>
    %11 = vector.extract_strided_slice %9 {offsets = [0, 0], sizes = [8, 128], strides = [1, 1]} : vector<64x128xf32> to vector<8x128xf32>
    %12 = arith.truncf %10 : vector<8x32xf32> to vector<8x32xbf16>
    %cst_14 = arith.constant dense<0.000000e+00> : vector<8x128xf32>
    %13 = tpu.matmul %12, %0, %cst_14 {dimension_numbers = #tpu.dot_dimension_numbers<[1], [0], [0], [1], [0, 0, 1, 1], [], []>} : vector<8x32xbf16>, vector<32x128xbf16>, vector<8x128xf32> -> vector<8x128xf32>
    %14 = arith.addf %11, %13 : vector<8x128xf32>
    %15 = vector.extract_strided_slice %14 {offsets = [0, 0], sizes = [8, 96], strides = [1, 1]} : vector<8x128xf32> to vector<8x96xf32>
    %16 = arith.negf %15 : vector<8x96xf32>
    %17 = math.exp %16 : vector<8x96xf32>
    %cst_15 = arith.constant 1.000000e+00 : f32
    %18 = vector.broadcast %cst_15 : f32 to vector<8x96xf32>
    %19 = arith.addf %18, %17 : vector<8x96xf32>
    %20 = arith.divf %18, %19 : vector<8x96xf32>
    %21 = vector.extract_strided_slice %14 {offsets = [0, 96], sizes = [8, 32], strides = [1, 1]} : vector<8x128xf32> to vector<8x32xf32>
    %22 = math.tanh %21 : vector<8x32xf32>
    %23 = vector.extract_strided_slice %20 {offsets = [0, 32], sizes = [8, 32], strides = [1, 1]} : vector<8x96xf32> to vector<8x32xf32>
    %24 = arith.mulf %23, %10 : vector<8x32xf32>
    %25 = vector.extract_strided_slice %20 {offsets = [0, 0], sizes = [8, 32], strides = [1, 1]} : vector<8x96xf32> to vector<8x32xf32>
    %26 = arith.mulf %25, %22 : vector<8x32xf32>
    %27 = arith.addf %24, %26 : vector<8x32xf32>
    %28 = vector.extract_strided_slice %20 {offsets = [0, 64], sizes = [8, 32], strides = [1, 1]} : vector<8x96xf32> to vector<8x32xf32>
    %29 = math.tanh %27 : vector<8x32xf32>
    %30 = arith.mulf %28, %29 : vector<8x32xf32>
    %31 = arith.truncf %30 : vector<8x32xf32> to vector<8x32xbf16>
    %32 = vector.extract_strided_slice %9 {offsets = [8, 0], sizes = [8, 128], strides = [1, 1]} : vector<64x128xf32> to vector<8x128xf32>
    %33 = arith.truncf %30 : vector<8x32xf32> to vector<8x32xbf16>
    %cst_16 = arith.constant dense<0.000000e+00> : vector<8x128xf32>
    %34 = tpu.matmul %33, %0, %cst_16 {dimension_numbers = #tpu.dot_dimension_numbers<[1], [0], [0], [1], [0, 0, 1, 1], [], []>} : vector<8x32xbf16>, vector<32x128xbf16>, vector<8x128xf32> -> vector<8x128xf32>
    %35 = arith.addf %32, %34 : vector<8x128xf32>
    %36 = vector.extract_strided_slice %35 {offsets = [0, 0], sizes = [8, 96], strides = [1, 1]} : vector<8x128xf32> to vector<8x96xf32>
    %37 = arith.negf %36 : vector<8x96xf32>
    %38 = math.exp %37 : vector<8x96xf32>
    %cst_17 = arith.constant 1.000000e+00 : f32
    %39 = vector.broadcast %cst_17 : f32 to vector<8x96xf32>
    %40 = arith.addf %39, %38 : vector<8x96xf32>
    %41 = arith.divf %39, %40 : vector<8x96xf32>
    %42 = vector.extract_strided_slice %35 {offsets = [0, 96], sizes = [8, 32], strides = [1, 1]} : vector<8x128xf32> to vector<8x32xf32>
    %43 = math.tanh %42 : vector<8x32xf32>
    %44 = vector.extract_strided_slice %41 {offsets = [0, 32], sizes = [8, 32], strides = [1, 1]} : vector<8x96xf32> to vector<8x32xf32>
    %45 = arith.mulf %44, %27 : vector<8x32xf32>
    %46 = vector.extract_strided_slice %41 {offsets = [0, 0], sizes = [8, 32], strides = [1, 1]} : vector<8x96xf32> to vector<8x32xf32>
    %47 = arith.mulf %46, %43 : vector<8x32xf32>
    %48 = arith.addf %45, %47 : vector<8x32xf32>
    %49 = vector.extract_strided_slice %41 {offsets = [0, 64], sizes = [8, 32], strides = [1, 1]} : vector<8x96xf32> to vector<8x32xf32>
    %50 = math.tanh %48 : vector<8x32xf32>
    %51 = arith.mulf %49, %50 : vector<8x32xf32>
    %cst_18 = arith.constant dense<0.000000e+00> : vector<8x128xf32>
    %52 = tpu.matmul %31, %1, %cst_18 {dimension_numbers = #tpu.dot_dimension_numbers<[1], [0], [0], [1], [0, 0, 1, 1], [], []>} : vector<8x32xbf16>, vector<32x128xbf16>, vector<8x128xf32> -> vector<8x128xf32>
    %53 = arith.truncf %10 : vector<8x32xf32> to vector<8x32xbf16>
    %cst_19 = arith.constant dense<0.000000e+00> : vector<8x128xf32>
    %54 = tpu.matmul %53, %2, %cst_19 {dimension_numbers = #tpu.dot_dimension_numbers<[1], [0], [0], [1], [0, 0, 1, 1], [], []>} : vector<8x32xbf16>, vector<32x128xbf16>, vector<8x128xf32> -> vector<8x128xf32>
    %55 = arith.addf %52, %54 : vector<8x128xf32>
    %56 = vector.broadcast %3 : vector<1x128xf32> to vector<8x128xf32>
    %57 = arith.addf %55, %56 : vector<8x128xf32>
    %58 = vector.extract_strided_slice %57 {offsets = [0, 0], sizes = [8, 96], strides = [1, 1]} : vector<8x128xf32> to vector<8x96xf32>
    %59 = arith.negf %58 : vector<8x96xf32>
    %60 = math.exp %59 : vector<8x96xf32>
    %cst_20 = arith.constant 1.000000e+00 : f32
    %61 = vector.broadcast %cst_20 : f32 to vector<8x96xf32>
    %62 = arith.addf %61, %60 : vector<8x96xf32>
    %63 = arith.divf %61, %62 : vector<8x96xf32>
    %64 = vector.extract_strided_slice %57 {offsets = [0, 96], sizes = [8, 32], strides = [1, 1]} : vector<8x128xf32> to vector<8x32xf32>
    %65 = math.tanh %64 : vector<8x32xf32>
    %66 = vector.extract_strided_slice %63 {offsets = [0, 32], sizes = [8, 32], strides = [1, 1]} : vector<8x96xf32> to vector<8x32xf32>
    %67 = arith.mulf %66, %10 : vector<8x32xf32>
    %68 = vector.extract_strided_slice %63 {offsets = [0, 0], sizes = [8, 32], strides = [1, 1]} : vector<8x96xf32> to vector<8x32xf32>
    %69 = arith.mulf %68, %65 : vector<8x32xf32>
    %70 = arith.addf %67, %69 : vector<8x32xf32>
    %71 = vector.extract_strided_slice %63 {offsets = [0, 64], sizes = [8, 32], strides = [1, 1]} : vector<8x96xf32> to vector<8x32xf32>
    %72 = math.tanh %70 : vector<8x32xf32>
    %73 = arith.mulf %71, %72 : vector<8x32xf32>
    %74 = arith.truncf %51 : vector<8x32xf32> to vector<8x32xbf16>
    %75 = vector.extract_strided_slice %9 {offsets = [16, 0], sizes = [8, 128], strides = [1, 1]} : vector<64x128xf32> to vector<8x128xf32>
    %76 = arith.truncf %51 : vector<8x32xf32> to vector<8x32xbf16>
    %cst_21 = arith.constant dense<0.000000e+00> : vector<8x128xf32>
    %77 = tpu.matmul %76, %0, %cst_21 {dimension_numbers = #tpu.dot_dimension_numbers<[1], [0], [0], [1], [0, 0, 1, 1], [], []>} : vector<8x32xbf16>, vector<32x128xbf16>, vector<8x128xf32> -> vector<8x128xf32>
    %78 = arith.addf %75, %77 : vector<8x128xf32>
    %79 = vector.extract_strided_slice %78 {offsets = [0, 0], sizes = [8, 96], strides = [1, 1]} : vector<8x128xf32> to vector<8x96xf32>
    %80 = arith.negf %79 : vector<8x96xf32>
    %81 = math.exp %80 : vector<8x96xf32>
    %cst_22 = arith.constant 1.000000e+00 : f32
    %82 = vector.broadcast %cst_22 : f32 to vector<8x96xf32>
    %83 = arith.addf %82, %81 : vector<8x96xf32>
    %84 = arith.divf %82, %83 : vector<8x96xf32>
    %85 = vector.extract_strided_slice %78 {offsets = [0, 96], sizes = [8, 32], strides = [1, 1]} : vector<8x128xf32> to vector<8x32xf32>
    %86 = math.tanh %85 : vector<8x32xf32>
    %87 = vector.extract_strided_slice %84 {offsets = [0, 32], sizes = [8, 32], strides = [1, 1]} : vector<8x96xf32> to vector<8x32xf32>
    %88 = arith.mulf %87, %48 : vector<8x32xf32>
    %89 = vector.extract_strided_slice %84 {offsets = [0, 0], sizes = [8, 32], strides = [1, 1]} : vector<8x96xf32> to vector<8x32xf32>
    %90 = arith.mulf %89, %86 : vector<8x32xf32>
    %91 = arith.addf %88, %90 : vector<8x32xf32>
    %92 = vector.extract_strided_slice %84 {offsets = [0, 64], sizes = [8, 32], strides = [1, 1]} : vector<8x96xf32> to vector<8x32xf32>
    %93 = math.tanh %91 : vector<8x32xf32>
    %94 = arith.mulf %92, %93 : vector<8x32xf32>
    %cst_23 = arith.constant dense<0.000000e+00> : vector<8x128xf32>
    %95 = tpu.matmul %74, %1, %cst_23 {dimension_numbers = #tpu.dot_dimension_numbers<[1], [0], [0], [1], [0, 0, 1, 1], [], []>} : vector<8x32xbf16>, vector<32x128xbf16>, vector<8x128xf32> -> vector<8x128xf32>
    %96 = arith.truncf %73 : vector<8x32xf32> to vector<8x32xbf16>
    %cst_24 = arith.constant dense<0.000000e+00> : vector<8x128xf32>
    %97 = tpu.matmul %96, %2, %cst_24 {dimension_numbers = #tpu.dot_dimension_numbers<[1], [0], [0], [1], [0, 0, 1, 1], [], []>} : vector<8x32xbf16>, vector<32x128xbf16>, vector<8x128xf32> -> vector<8x128xf32>
    %98 = arith.addf %95, %97 : vector<8x128xf32>
    %99 = vector.broadcast %3 : vector<1x128xf32> to vector<8x128xf32>
    %100 = arith.addf %98, %99 : vector<8x128xf32>
    %101 = vector.extract_strided_slice %100 {offsets = [0, 0], sizes = [8, 96], strides = [1, 1]} : vector<8x128xf32> to vector<8x96xf32>
    %102 = arith.negf %101 : vector<8x96xf32>
    %103 = math.exp %102 : vector<8x96xf32>
    %cst_25 = arith.constant 1.000000e+00 : f32
    %104 = vector.broadcast %cst_25 : f32 to vector<8x96xf32>
    %105 = arith.addf %104, %103 : vector<8x96xf32>
    %106 = arith.divf %104, %105 : vector<8x96xf32>
    %107 = vector.extract_strided_slice %100 {offsets = [0, 96], sizes = [8, 32], strides = [1, 1]} : vector<8x128xf32> to vector<8x32xf32>
    %108 = math.tanh %107 : vector<8x32xf32>
    %109 = vector.extract_strided_slice %106 {offsets = [0, 32], sizes = [8, 32], strides = [1, 1]} : vector<8x96xf32> to vector<8x32xf32>
    %110 = arith.mulf %109, %70 : vector<8x32xf32>
    %111 = vector.extract_strided_slice %106 {offsets = [0, 0], sizes = [8, 32], strides = [1, 1]} : vector<8x96xf32> to vector<8x32xf32>
    %112 = arith.mulf %111, %108 : vector<8x32xf32>
    %113 = arith.addf %110, %112 : vector<8x32xf32>
    %114 = vector.extract_strided_slice %106 {offsets = [0, 64], sizes = [8, 32], strides = [1, 1]} : vector<8x96xf32> to vector<8x32xf32>
    %115 = math.tanh %113 : vector<8x32xf32>
    %116 = arith.mulf %114, %115 : vector<8x32xf32>
    %117 = arith.truncf %94 : vector<8x32xf32> to vector<8x32xbf16>
    %118 = vector.extract_strided_slice %9 {offsets = [24, 0], sizes = [8, 128], strides = [1, 1]} : vector<64x128xf32> to vector<8x128xf32>
    %119 = arith.truncf %94 : vector<8x32xf32> to vector<8x32xbf16>
    %cst_26 = arith.constant dense<0.000000e+00> : vector<8x128xf32>
    %120 = tpu.matmul %119, %0, %cst_26 {dimension_numbers = #tpu.dot_dimension_numbers<[1], [0], [0], [1], [0, 0, 1, 1], [], []>} : vector<8x32xbf16>, vector<32x128xbf16>, vector<8x128xf32> -> vector<8x128xf32>
    %121 = arith.addf %118, %120 : vector<8x128xf32>
    %122 = vector.extract_strided_slice %121 {offsets = [0, 0], sizes = [8, 96], strides = [1, 1]} : vector<8x128xf32> to vector<8x96xf32>
    %123 = arith.negf %122 : vector<8x96xf32>
    %124 = math.exp %123 : vector<8x96xf32>
    %cst_27 = arith.constant 1.000000e+00 : f32
    %125 = vector.broadcast %cst_27 : f32 to vector<8x96xf32>
    %126 = arith.addf %125, %124 : vector<8x96xf32>
    %127 = arith.divf %125, %126 : vector<8x96xf32>
    %128 = vector.extract_strided_slice %121 {offsets = [0, 96], sizes = [8, 32], strides = [1, 1]} : vector<8x128xf32> to vector<8x32xf32>
    %129 = math.tanh %128 : vector<8x32xf32>
    %130 = vector.extract_strided_slice %127 {offsets = [0, 32], sizes = [8, 32], strides = [1, 1]} : vector<8x96xf32> to vector<8x32xf32>
    %131 = arith.mulf %130, %91 : vector<8x32xf32>
    %132 = vector.extract_strided_slice %127 {offsets = [0, 0], sizes = [8, 32], strides = [1, 1]} : vector<8x96xf32> to vector<8x32xf32>
    %133 = arith.mulf %132, %129 : vector<8x32xf32>
    %134 = arith.addf %131, %133 : vector<8x32xf32>
    %135 = vector.extract_strided_slice %127 {offsets = [0, 64], sizes = [8, 32], strides = [1, 1]} : vector<8x96xf32> to vector<8x32xf32>
    %136 = math.tanh %134 : vector<8x32xf32>
    %137 = arith.mulf %135, %136 : vector<8x32xf32>
    %cst_28 = arith.constant dense<0.000000e+00> : vector<8x128xf32>
    %138 = tpu.matmul %117, %1, %cst_28 {dimension_numbers = #tpu.dot_dimension_numbers<[1], [0], [0], [1], [0, 0, 1, 1], [], []>} : vector<8x32xbf16>, vector<32x128xbf16>, vector<8x128xf32> -> vector<8x128xf32>
    %139 = arith.truncf %116 : vector<8x32xf32> to vector<8x32xbf16>
    %cst_29 = arith.constant dense<0.000000e+00> : vector<8x128xf32>
    %140 = tpu.matmul %139, %2, %cst_29 {dimension_numbers = #tpu.dot_dimension_numbers<[1], [0], [0], [1], [0, 0, 1, 1], [], []>} : vector<8x32xbf16>, vector<32x128xbf16>, vector<8x128xf32> -> vector<8x128xf32>
    %141 = arith.addf %138, %140 : vector<8x128xf32>
    %142 = vector.broadcast %3 : vector<1x128xf32> to vector<8x128xf32>
    %143 = arith.addf %141, %142 : vector<8x128xf32>
    %144 = vector.extract_strided_slice %143 {offsets = [0, 0], sizes = [8, 96], strides = [1, 1]} : vector<8x128xf32> to vector<8x96xf32>
    %145 = arith.negf %144 : vector<8x96xf32>
    %146 = math.exp %145 : vector<8x96xf32>
    %cst_30 = arith.constant 1.000000e+00 : f32
    %147 = vector.broadcast %cst_30 : f32 to vector<8x96xf32>
    %148 = arith.addf %147, %146 : vector<8x96xf32>
    %149 = arith.divf %147, %148 : vector<8x96xf32>
    %150 = vector.extract_strided_slice %143 {offsets = [0, 96], sizes = [8, 32], strides = [1, 1]} : vector<8x128xf32> to vector<8x32xf32>
    %151 = math.tanh %150 : vector<8x32xf32>
    %152 = vector.extract_strided_slice %149 {offsets = [0, 32], sizes = [8, 32], strides = [1, 1]} : vector<8x96xf32> to vector<8x32xf32>
    %153 = arith.mulf %152, %113 : vector<8x32xf32>
    %154 = vector.extract_strided_slice %149 {offsets = [0, 0], sizes = [8, 32], strides = [1, 1]} : vector<8x96xf32> to vector<8x32xf32>
    %155 = arith.mulf %154, %151 : vector<8x32xf32>
    %156 = arith.addf %153, %155 : vector<8x32xf32>
    %157 = vector.extract_strided_slice %149 {offsets = [0, 64], sizes = [8, 32], strides = [1, 1]} : vector<8x96xf32> to vector<8x32xf32>
    %158 = math.tanh %156 : vector<8x32xf32>
    %159 = arith.mulf %157, %158 : vector<8x32xf32>
    %160 = arith.truncf %137 : vector<8x32xf32> to vector<8x32xbf16>
    %161 = vector.extract_strided_slice %9 {offsets = [32, 0], sizes = [8, 128], strides = [1, 1]} : vector<64x128xf32> to vector<8x128xf32>
    %162 = arith.truncf %137 : vector<8x32xf32> to vector<8x32xbf16>
    %cst_31 = arith.constant dense<0.000000e+00> : vector<8x128xf32>
    %163 = tpu.matmul %162, %0, %cst_31 {dimension_numbers = #tpu.dot_dimension_numbers<[1], [0], [0], [1], [0, 0, 1, 1], [], []>} : vector<8x32xbf16>, vector<32x128xbf16>, vector<8x128xf32> -> vector<8x128xf32>
    %164 = arith.addf %161, %163 : vector<8x128xf32>
    %165 = vector.extract_strided_slice %164 {offsets = [0, 0], sizes = [8, 96], strides = [1, 1]} : vector<8x128xf32> to vector<8x96xf32>
    %166 = arith.negf %165 : vector<8x96xf32>
    %167 = math.exp %166 : vector<8x96xf32>
    %cst_32 = arith.constant 1.000000e+00 : f32
    %168 = vector.broadcast %cst_32 : f32 to vector<8x96xf32>
    %169 = arith.addf %168, %167 : vector<8x96xf32>
    %170 = arith.divf %168, %169 : vector<8x96xf32>
    %171 = vector.extract_strided_slice %164 {offsets = [0, 96], sizes = [8, 32], strides = [1, 1]} : vector<8x128xf32> to vector<8x32xf32>
    %172 = math.tanh %171 : vector<8x32xf32>
    %173 = vector.extract_strided_slice %170 {offsets = [0, 32], sizes = [8, 32], strides = [1, 1]} : vector<8x96xf32> to vector<8x32xf32>
    %174 = arith.mulf %173, %134 : vector<8x32xf32>
    %175 = vector.extract_strided_slice %170 {offsets = [0, 0], sizes = [8, 32], strides = [1, 1]} : vector<8x96xf32> to vector<8x32xf32>
    %176 = arith.mulf %175, %172 : vector<8x32xf32>
    %177 = arith.addf %174, %176 : vector<8x32xf32>
    %178 = vector.extract_strided_slice %170 {offsets = [0, 64], sizes = [8, 32], strides = [1, 1]} : vector<8x96xf32> to vector<8x32xf32>
    %179 = math.tanh %177 : vector<8x32xf32>
    %180 = arith.mulf %178, %179 : vector<8x32xf32>
    %cst_33 = arith.constant dense<0.000000e+00> : vector<8x128xf32>
    %181 = tpu.matmul %160, %1, %cst_33 {dimension_numbers = #tpu.dot_dimension_numbers<[1], [0], [0], [1], [0, 0, 1, 1], [], []>} : vector<8x32xbf16>, vector<32x128xbf16>, vector<8x128xf32> -> vector<8x128xf32>
    %182 = arith.truncf %159 : vector<8x32xf32> to vector<8x32xbf16>
    %cst_34 = arith.constant dense<0.000000e+00> : vector<8x128xf32>
    %183 = tpu.matmul %182, %2, %cst_34 {dimension_numbers = #tpu.dot_dimension_numbers<[1], [0], [0], [1], [0, 0, 1, 1], [], []>} : vector<8x32xbf16>, vector<32x128xbf16>, vector<8x128xf32> -> vector<8x128xf32>
    %184 = arith.addf %181, %183 : vector<8x128xf32>
    %185 = vector.broadcast %3 : vector<1x128xf32> to vector<8x128xf32>
    %186 = arith.addf %184, %185 : vector<8x128xf32>
    %187 = vector.extract_strided_slice %186 {offsets = [0, 0], sizes = [8, 96], strides = [1, 1]} : vector<8x128xf32> to vector<8x96xf32>
    %188 = arith.negf %187 : vector<8x96xf32>
    %189 = math.exp %188 : vector<8x96xf32>
    %cst_35 = arith.constant 1.000000e+00 : f32
    %190 = vector.broadcast %cst_35 : f32 to vector<8x96xf32>
    %191 = arith.addf %190, %189 : vector<8x96xf32>
    %192 = arith.divf %190, %191 : vector<8x96xf32>
    %193 = vector.extract_strided_slice %186 {offsets = [0, 96], sizes = [8, 32], strides = [1, 1]} : vector<8x128xf32> to vector<8x32xf32>
    %194 = math.tanh %193 : vector<8x32xf32>
    %195 = vector.extract_strided_slice %192 {offsets = [0, 32], sizes = [8, 32], strides = [1, 1]} : vector<8x96xf32> to vector<8x32xf32>
    %196 = arith.mulf %195, %156 : vector<8x32xf32>
    %197 = vector.extract_strided_slice %192 {offsets = [0, 0], sizes = [8, 32], strides = [1, 1]} : vector<8x96xf32> to vector<8x32xf32>
    %198 = arith.mulf %197, %194 : vector<8x32xf32>
    %199 = arith.addf %196, %198 : vector<8x32xf32>
    %200 = vector.extract_strided_slice %192 {offsets = [0, 64], sizes = [8, 32], strides = [1, 1]} : vector<8x96xf32> to vector<8x32xf32>
    %201 = math.tanh %199 : vector<8x32xf32>
    %202 = arith.mulf %200, %201 : vector<8x32xf32>
    %203 = arith.truncf %180 : vector<8x32xf32> to vector<8x32xbf16>
    %204 = vector.extract_strided_slice %9 {offsets = [40, 0], sizes = [8, 128], strides = [1, 1]} : vector<64x128xf32> to vector<8x128xf32>
    %205 = arith.truncf %180 : vector<8x32xf32> to vector<8x32xbf16>
    %cst_36 = arith.constant dense<0.000000e+00> : vector<8x128xf32>
    %206 = tpu.matmul %205, %0, %cst_36 {dimension_numbers = #tpu.dot_dimension_numbers<[1], [0], [0], [1], [0, 0, 1, 1], [], []>} : vector<8x32xbf16>, vector<32x128xbf16>, vector<8x128xf32> -> vector<8x128xf32>
    %207 = arith.addf %204, %206 : vector<8x128xf32>
    %208 = vector.extract_strided_slice %207 {offsets = [0, 0], sizes = [8, 96], strides = [1, 1]} : vector<8x128xf32> to vector<8x96xf32>
    %209 = arith.negf %208 : vector<8x96xf32>
    %210 = math.exp %209 : vector<8x96xf32>
    %cst_37 = arith.constant 1.000000e+00 : f32
    %211 = vector.broadcast %cst_37 : f32 to vector<8x96xf32>
    %212 = arith.addf %211, %210 : vector<8x96xf32>
    %213 = arith.divf %211, %212 : vector<8x96xf32>
    %214 = vector.extract_strided_slice %207 {offsets = [0, 96], sizes = [8, 32], strides = [1, 1]} : vector<8x128xf32> to vector<8x32xf32>
    %215 = math.tanh %214 : vector<8x32xf32>
    %216 = vector.extract_strided_slice %213 {offsets = [0, 32], sizes = [8, 32], strides = [1, 1]} : vector<8x96xf32> to vector<8x32xf32>
    %217 = arith.mulf %216, %177 : vector<8x32xf32>
    %218 = vector.extract_strided_slice %213 {offsets = [0, 0], sizes = [8, 32], strides = [1, 1]} : vector<8x96xf32> to vector<8x32xf32>
    %219 = arith.mulf %218, %215 : vector<8x32xf32>
    %220 = arith.addf %217, %219 : vector<8x32xf32>
    %221 = vector.extract_strided_slice %213 {offsets = [0, 64], sizes = [8, 32], strides = [1, 1]} : vector<8x96xf32> to vector<8x32xf32>
    %222 = math.tanh %220 : vector<8x32xf32>
    %223 = arith.mulf %221, %222 : vector<8x32xf32>
    %cst_38 = arith.constant dense<0.000000e+00> : vector<8x128xf32>
    %224 = tpu.matmul %203, %1, %cst_38 {dimension_numbers = #tpu.dot_dimension_numbers<[1], [0], [0], [1], [0, 0, 1, 1], [], []>} : vector<8x32xbf16>, vector<32x128xbf16>, vector<8x128xf32> -> vector<8x128xf32>
    %225 = arith.truncf %202 : vector<8x32xf32> to vector<8x32xbf16>
    %cst_39 = arith.constant dense<0.000000e+00> : vector<8x128xf32>
    %226 = tpu.matmul %225, %2, %cst_39 {dimension_numbers = #tpu.dot_dimension_numbers<[1], [0], [0], [1], [0, 0, 1, 1], [], []>} : vector<8x32xbf16>, vector<32x128xbf16>, vector<8x128xf32> -> vector<8x128xf32>
    %227 = arith.addf %224, %226 : vector<8x128xf32>
    %228 = vector.broadcast %3 : vector<1x128xf32> to vector<8x128xf32>
    %229 = arith.addf %227, %228 : vector<8x128xf32>
    %230 = vector.extract_strided_slice %229 {offsets = [0, 0], sizes = [8, 96], strides = [1, 1]} : vector<8x128xf32> to vector<8x96xf32>
    %231 = arith.negf %230 : vector<8x96xf32>
    %232 = math.exp %231 : vector<8x96xf32>
    %cst_40 = arith.constant 1.000000e+00 : f32
    %233 = vector.broadcast %cst_40 : f32 to vector<8x96xf32>
    %234 = arith.addf %233, %232 : vector<8x96xf32>
    %235 = arith.divf %233, %234 : vector<8x96xf32>
    %236 = vector.extract_strided_slice %229 {offsets = [0, 96], sizes = [8, 32], strides = [1, 1]} : vector<8x128xf32> to vector<8x32xf32>
    %237 = math.tanh %236 : vector<8x32xf32>
    %238 = vector.extract_strided_slice %235 {offsets = [0, 32], sizes = [8, 32], strides = [1, 1]} : vector<8x96xf32> to vector<8x32xf32>
    %239 = arith.mulf %238, %199 : vector<8x32xf32>
    %240 = vector.extract_strided_slice %235 {offsets = [0, 0], sizes = [8, 32], strides = [1, 1]} : vector<8x96xf32> to vector<8x32xf32>
    %241 = arith.mulf %240, %237 : vector<8x32xf32>
    %242 = arith.addf %239, %241 : vector<8x32xf32>
    %243 = vector.extract_strided_slice %235 {offsets = [0, 64], sizes = [8, 32], strides = [1, 1]} : vector<8x96xf32> to vector<8x32xf32>
    %244 = math.tanh %242 : vector<8x32xf32>
    %245 = arith.mulf %243, %244 : vector<8x32xf32>
    %246 = arith.truncf %223 : vector<8x32xf32> to vector<8x32xbf16>
    %247 = vector.extract_strided_slice %9 {offsets = [48, 0], sizes = [8, 128], strides = [1, 1]} : vector<64x128xf32> to vector<8x128xf32>
    %248 = arith.truncf %223 : vector<8x32xf32> to vector<8x32xbf16>
    %cst_41 = arith.constant dense<0.000000e+00> : vector<8x128xf32>
    %249 = tpu.matmul %248, %0, %cst_41 {dimension_numbers = #tpu.dot_dimension_numbers<[1], [0], [0], [1], [0, 0, 1, 1], [], []>} : vector<8x32xbf16>, vector<32x128xbf16>, vector<8x128xf32> -> vector<8x128xf32>
    %250 = arith.addf %247, %249 : vector<8x128xf32>
    %251 = vector.extract_strided_slice %250 {offsets = [0, 0], sizes = [8, 96], strides = [1, 1]} : vector<8x128xf32> to vector<8x96xf32>
    %252 = arith.negf %251 : vector<8x96xf32>
    %253 = math.exp %252 : vector<8x96xf32>
    %cst_42 = arith.constant 1.000000e+00 : f32
    %254 = vector.broadcast %cst_42 : f32 to vector<8x96xf32>
    %255 = arith.addf %254, %253 : vector<8x96xf32>
    %256 = arith.divf %254, %255 : vector<8x96xf32>
    %257 = vector.extract_strided_slice %250 {offsets = [0, 96], sizes = [8, 32], strides = [1, 1]} : vector<8x128xf32> to vector<8x32xf32>
    %258 = math.tanh %257 : vector<8x32xf32>
    %259 = vector.extract_strided_slice %256 {offsets = [0, 32], sizes = [8, 32], strides = [1, 1]} : vector<8x96xf32> to vector<8x32xf32>
    %260 = arith.mulf %259, %220 : vector<8x32xf32>
    %261 = vector.extract_strided_slice %256 {offsets = [0, 0], sizes = [8, 32], strides = [1, 1]} : vector<8x96xf32> to vector<8x32xf32>
    %262 = arith.mulf %261, %258 : vector<8x32xf32>
    %263 = arith.addf %260, %262 : vector<8x32xf32>
    %264 = vector.extract_strided_slice %256 {offsets = [0, 64], sizes = [8, 32], strides = [1, 1]} : vector<8x96xf32> to vector<8x32xf32>
    %265 = math.tanh %263 : vector<8x32xf32>
    %266 = arith.mulf %264, %265 : vector<8x32xf32>
    %cst_43 = arith.constant dense<0.000000e+00> : vector<8x128xf32>
    %267 = tpu.matmul %246, %1, %cst_43 {dimension_numbers = #tpu.dot_dimension_numbers<[1], [0], [0], [1], [0, 0, 1, 1], [], []>} : vector<8x32xbf16>, vector<32x128xbf16>, vector<8x128xf32> -> vector<8x128xf32>
    %268 = arith.truncf %245 : vector<8x32xf32> to vector<8x32xbf16>
    %cst_44 = arith.constant dense<0.000000e+00> : vector<8x128xf32>
    %269 = tpu.matmul %268, %2, %cst_44 {dimension_numbers = #tpu.dot_dimension_numbers<[1], [0], [0], [1], [0, 0, 1, 1], [], []>} : vector<8x32xbf16>, vector<32x128xbf16>, vector<8x128xf32> -> vector<8x128xf32>
    %270 = arith.addf %267, %269 : vector<8x128xf32>
    %271 = vector.broadcast %3 : vector<1x128xf32> to vector<8x128xf32>
    %272 = arith.addf %270, %271 : vector<8x128xf32>
    %273 = vector.extract_strided_slice %272 {offsets = [0, 0], sizes = [8, 96], strides = [1, 1]} : vector<8x128xf32> to vector<8x96xf32>
    %274 = arith.negf %273 : vector<8x96xf32>
    %275 = math.exp %274 : vector<8x96xf32>
    %cst_45 = arith.constant 1.000000e+00 : f32
    %276 = vector.broadcast %cst_45 : f32 to vector<8x96xf32>
    %277 = arith.addf %276, %275 : vector<8x96xf32>
    %278 = arith.divf %276, %277 : vector<8x96xf32>
    %279 = vector.extract_strided_slice %272 {offsets = [0, 96], sizes = [8, 32], strides = [1, 1]} : vector<8x128xf32> to vector<8x32xf32>
    %280 = math.tanh %279 : vector<8x32xf32>
    %281 = vector.extract_strided_slice %278 {offsets = [0, 32], sizes = [8, 32], strides = [1, 1]} : vector<8x96xf32> to vector<8x32xf32>
    %282 = arith.mulf %281, %242 : vector<8x32xf32>
    %283 = vector.extract_strided_slice %278 {offsets = [0, 0], sizes = [8, 32], strides = [1, 1]} : vector<8x96xf32> to vector<8x32xf32>
    %284 = arith.mulf %283, %280 : vector<8x32xf32>
    %285 = arith.addf %282, %284 : vector<8x32xf32>
    %286 = vector.extract_strided_slice %278 {offsets = [0, 64], sizes = [8, 32], strides = [1, 1]} : vector<8x96xf32> to vector<8x32xf32>
    %287 = math.tanh %285 : vector<8x32xf32>
    %288 = arith.mulf %286, %287 : vector<8x32xf32>
    %289 = arith.truncf %266 : vector<8x32xf32> to vector<8x32xbf16>
    %290 = vector.extract_strided_slice %9 {offsets = [56, 0], sizes = [8, 128], strides = [1, 1]} : vector<64x128xf32> to vector<8x128xf32>
    %291 = arith.truncf %266 : vector<8x32xf32> to vector<8x32xbf16>
    %cst_46 = arith.constant dense<0.000000e+00> : vector<8x128xf32>
    %292 = tpu.matmul %291, %0, %cst_46 {dimension_numbers = #tpu.dot_dimension_numbers<[1], [0], [0], [1], [0, 0, 1, 1], [], []>} : vector<8x32xbf16>, vector<32x128xbf16>, vector<8x128xf32> -> vector<8x128xf32>
    %293 = arith.addf %290, %292 : vector<8x128xf32>
    %294 = vector.extract_strided_slice %293 {offsets = [0, 0], sizes = [8, 96], strides = [1, 1]} : vector<8x128xf32> to vector<8x96xf32>
    %295 = arith.negf %294 : vector<8x96xf32>
    %296 = math.exp %295 : vector<8x96xf32>
    %cst_47 = arith.constant 1.000000e+00 : f32
    %297 = vector.broadcast %cst_47 : f32 to vector<8x96xf32>
    %298 = arith.addf %297, %296 : vector<8x96xf32>
    %299 = arith.divf %297, %298 : vector<8x96xf32>
    %300 = vector.extract_strided_slice %293 {offsets = [0, 96], sizes = [8, 32], strides = [1, 1]} : vector<8x128xf32> to vector<8x32xf32>
    %301 = math.tanh %300 : vector<8x32xf32>
    %302 = vector.extract_strided_slice %299 {offsets = [0, 32], sizes = [8, 32], strides = [1, 1]} : vector<8x96xf32> to vector<8x32xf32>
    %303 = arith.mulf %302, %263 : vector<8x32xf32>
    %304 = vector.extract_strided_slice %299 {offsets = [0, 0], sizes = [8, 32], strides = [1, 1]} : vector<8x96xf32> to vector<8x32xf32>
    %305 = arith.mulf %304, %301 : vector<8x32xf32>
    %306 = arith.addf %303, %305 : vector<8x32xf32>
    %307 = vector.extract_strided_slice %299 {offsets = [0, 64], sizes = [8, 32], strides = [1, 1]} : vector<8x96xf32> to vector<8x32xf32>
    %308 = math.tanh %306 : vector<8x32xf32>
    %309 = arith.mulf %307, %308 : vector<8x32xf32>
    %cst_48 = arith.constant dense<0.000000e+00> : vector<8x128xf32>
    %310 = tpu.matmul %289, %1, %cst_48 {dimension_numbers = #tpu.dot_dimension_numbers<[1], [0], [0], [1], [0, 0, 1, 1], [], []>} : vector<8x32xbf16>, vector<32x128xbf16>, vector<8x128xf32> -> vector<8x128xf32>
    %311 = arith.truncf %288 : vector<8x32xf32> to vector<8x32xbf16>
    %cst_49 = arith.constant dense<0.000000e+00> : vector<8x128xf32>
    %312 = tpu.matmul %311, %2, %cst_49 {dimension_numbers = #tpu.dot_dimension_numbers<[1], [0], [0], [1], [0, 0, 1, 1], [], []>} : vector<8x32xbf16>, vector<32x128xbf16>, vector<8x128xf32> -> vector<8x128xf32>
    %313 = arith.addf %310, %312 : vector<8x128xf32>
    %314 = vector.broadcast %3 : vector<1x128xf32> to vector<8x128xf32>
    %315 = arith.addf %313, %314 : vector<8x128xf32>
    %316 = vector.extract_strided_slice %315 {offsets = [0, 0], sizes = [8, 96], strides = [1, 1]} : vector<8x128xf32> to vector<8x96xf32>
    %317 = arith.negf %316 : vector<8x96xf32>
    %318 = math.exp %317 : vector<8x96xf32>
    %cst_50 = arith.constant 1.000000e+00 : f32
    %319 = vector.broadcast %cst_50 : f32 to vector<8x96xf32>
    %320 = arith.addf %319, %318 : vector<8x96xf32>
    %321 = arith.divf %319, %320 : vector<8x96xf32>
    %322 = vector.extract_strided_slice %315 {offsets = [0, 96], sizes = [8, 32], strides = [1, 1]} : vector<8x128xf32> to vector<8x32xf32>
    %323 = math.tanh %322 : vector<8x32xf32>
    %324 = vector.extract_strided_slice %321 {offsets = [0, 32], sizes = [8, 32], strides = [1, 1]} : vector<8x96xf32> to vector<8x32xf32>
    %325 = arith.mulf %324, %285 : vector<8x32xf32>
    %326 = vector.extract_strided_slice %321 {offsets = [0, 0], sizes = [8, 32], strides = [1, 1]} : vector<8x96xf32> to vector<8x32xf32>
    %327 = arith.mulf %326, %323 : vector<8x32xf32>
    %328 = arith.addf %325, %327 : vector<8x32xf32>
    %329 = vector.extract_strided_slice %321 {offsets = [0, 64], sizes = [8, 32], strides = [1, 1]} : vector<8x96xf32> to vector<8x32xf32>
    %330 = math.tanh %328 : vector<8x32xf32>
    %331 = arith.mulf %329, %330 : vector<8x32xf32>
    %332 = arith.truncf %309 : vector<8x32xf32> to vector<8x32xbf16>
    %cst_51 = arith.constant dense<0.000000e+00> : vector<8x128xf32>
    %333 = tpu.matmul %332, %1, %cst_51 {dimension_numbers = #tpu.dot_dimension_numbers<[1], [0], [0], [1], [0, 0, 1, 1], [], []>} : vector<8x32xbf16>, vector<32x128xbf16>, vector<8x128xf32> -> vector<8x128xf32>
    %334 = arith.truncf %331 : vector<8x32xf32> to vector<8x32xbf16>
    %cst_52 = arith.constant dense<0.000000e+00> : vector<8x128xf32>
    %335 = tpu.matmul %334, %2, %cst_52 {dimension_numbers = #tpu.dot_dimension_numbers<[1], [0], [0], [1], [0, 0, 1, 1], [], []>} : vector<8x32xbf16>, vector<32x128xbf16>, vector<8x128xf32> -> vector<8x128xf32>
    %336 = arith.addf %333, %335 : vector<8x128xf32>
    %337 = vector.broadcast %3 : vector<1x128xf32> to vector<8x128xf32>
    %338 = arith.addf %336, %337 : vector<8x128xf32>
    %339 = vector.extract_strided_slice %338 {offsets = [0, 0], sizes = [8, 96], strides = [1, 1]} : vector<8x128xf32> to vector<8x96xf32>
    %340 = arith.negf %339 : vector<8x96xf32>
    %341 = math.exp %340 : vector<8x96xf32>
    %cst_53 = arith.constant 1.000000e+00 : f32
    %342 = vector.broadcast %cst_53 : f32 to vector<8x96xf32>
    %343 = arith.addf %342, %341 : vector<8x96xf32>
    %344 = arith.divf %342, %343 : vector<8x96xf32>
    %345 = vector.extract_strided_slice %338 {offsets = [0, 96], sizes = [8, 32], strides = [1, 1]} : vector<8x128xf32> to vector<8x32xf32>
    %346 = math.tanh %345 : vector<8x32xf32>
    %347 = vector.extract_strided_slice %344 {offsets = [0, 32], sizes = [8, 32], strides = [1, 1]} : vector<8x96xf32> to vector<8x32xf32>
    %348 = arith.mulf %347, %328 : vector<8x32xf32>
    %349 = vector.extract_strided_slice %344 {offsets = [0, 0], sizes = [8, 32], strides = [1, 1]} : vector<8x96xf32> to vector<8x32xf32>
    %350 = arith.mulf %349, %346 : vector<8x32xf32>
    %351 = arith.addf %348, %350 : vector<8x32xf32>
    %352 = vector.extract_strided_slice %344 {offsets = [0, 64], sizes = [8, 32], strides = [1, 1]} : vector<8x96xf32> to vector<8x32xf32>
    %353 = math.tanh %351 : vector<8x32xf32>
    %354 = arith.mulf %352, %353 : vector<8x32xf32>
    %c0_54 = arith.constant 0 : index
    %c0_55 = arith.constant 0 : index
    %355 = vector.load %arg7[%c0_54, %c0_55] : memref<1x32xf32, #tpu.memory_space<vmem>>, vector<1x32xf32>
    %356 = vector.broadcast %355 : vector<1x32xf32> to vector<8x32xf32>
    %357 = arith.mulf %354, %356 : vector<8x32xf32>
    %cst_56 = arith.constant dense<0.000000e+00> : vector<8xf32>
    %358 = vector.multi_reduction <add>, %357, %cst_56 [1] : vector<8x32xf32> to vector<8xf32>
    %359 = vector.shape_cast %358 : vector<8xf32> to vector<8x1xf32>
    %c0_57 = arith.constant 0 : index
    %c0_58 = arith.constant 0 : index
    %360 = vector.load %arg8[%c0_57, %c0_58] : memref<1x1xf32, #tpu.memory_space<vmem>>, vector<1x1xf32>
    %361 = vector.broadcast %360 : vector<1x1xf32> to vector<8x1xf32>
    %362 = arith.addf %359, %361 : vector<8x1xf32>
    %363 = arith.negf %362 : vector<8x1xf32>
    %364 = math.exp %363 : vector<8x1xf32>
    %cst_59 = arith.constant 1.000000e+00 : f32
    %365 = vector.broadcast %cst_59 : f32 to vector<8x1xf32>
    %366 = arith.addf %365, %364 : vector<8x1xf32>
    %367 = arith.divf %365, %366 : vector<8x1xf32>
    %c0_60 = arith.constant 0 : index
    %c0_61 = arith.constant 0 : index
    %368 = vector.load %arg9[%c0_60, %c0_61] : memref<8x1xf32, #tpu.memory_space<vmem>>, vector<8x1xf32>
    tpu.vector_store %arg9[%c0_60, %c0_61], %367 {strides = array<i32>} : memref<8x1xf32, #tpu.memory_space<vmem>>, vector<8x1xf32>,
    return
  }
}

</mosaic_0001>

<llo_original>
// kernel: lstm_forward.1
$region0: #{lstm_forward.1}
  #allocation0 [shape = 'u32[]', space=smem, size = 0x4, offset = 0x4, fixed_abs, tag = 'smem constant byte address 0x4 - core index']
  #allocation1 [shape = 'u32[72,128]{1,0:T(1,128)}', space=vmem, size = 0x9000, scoped, tag = 'internal scratch']
  #allocation2 [shape = 'f32[1,1]{1,0:T(1,128)S(1)}', space=vmem, size = 0x200, scoped, tag = 'scoped memory for lstm_forward.1']
  %s0 = inlined_call_operand.vmem [shape: bf16[64,16], index: 0, kind: input, shape index: {}]
  %s1 = inlined_call_operand.vmem [shape: bf16[16,128], index: 1, kind: input, shape index: {}]
  %s2 = inlined_call_operand.vmem [shape: bf16[32,128], index: 2, kind: input, shape index: {}]
  %s3 = inlined_call_operand.vmem [shape: f32[1,128], index: 3, kind: input, shape index: {}]
  %s4 = inlined_call_operand.vmem [shape: bf16[32,128], index: 4, kind: input, shape index: {}]
  %s5 = inlined_call_operand.vmem [shape: bf16[32,128], index: 5, kind: input, shape index: {}]
  %s6 = inlined_call_operand.vmem [shape: f32[1,128], index: 6, kind: input, shape index: {}]
  %s7 = inlined_call_operand.vmem [shape: f32[1,32], index: 7, kind: input, shape index: {}]
  %s8 = inlined_call_operand.<no memory space> [shape: f32[1,1], index: 8, kind: input, shape index: {}]
  %s9 = inlined_call_operand.vmem [shape: f32[8,1], index: 9, kind: output, shape index: {}]
  %s10 = sld [smem:[#allocation0]]
  $region46: #{lstm_forward.1} parent=0
    _
  %s12 = ssub.s32 1, %s10
  %s13 = scalar_select 0, %s12, %s10
  %v14 = vstv %s8
  %15 = vst [vmem:[#allocation2] sm:$0x1] %v14
  // Predicated region
  $region2: #{lstm_forward.1} parent=0 // pred_check
    _
  $region3: #{lstm_forward.1} parent=0 // pred_check_branch
    %17 = sbr.rel (0) target = $region5
  $region4: #{lstm_forward.1} parent=0 // pred_region
    _
  $region5: #{lstm_forward.1} parent=0 // pred_fallthru
    _
  // Predicated region
  $region6: #{lstm_forward.1} parent=0 // pred_check
    _
  $region7: #{lstm_forward.1} parent=0 // pred_check_branch
    %19 = sbr.rel (0) target = $region9
  $region8: #{lstm_forward.1} parent=0 // pred_region
    _
  $region9: #{lstm_forward.1} parent=0 // pred_fallthru
    _
  // Predicated region
  $region10: #{lstm_forward.1} parent=0 // pred_check
    _
  $region11: #{lstm_forward.1} parent=0 // pred_check_branch
    %21 = sbr.rel (0) target = $region13
  $region12: #{lstm_forward.1} parent=0 // pred_region
    _
  $region13: #{lstm_forward.1} parent=0 // pred_fallthru
    _
  // Predicated region
  $region14: #{lstm_forward.1} parent=0 // pred_check
    _
  $region15: #{lstm_forward.1} parent=0 // pred_check_branch
    %23 = sbr.rel (0) target = $region17
  $region16: #{lstm_forward.1} parent=0 // pred_region
    _
  $region17: #{lstm_forward.1} parent=0 // pred_fallthru
    _
  // Predicated region
  $region18: #{lstm_forward.1} parent=0 // pred_check
    _
  $region19: #{lstm_forward.1} parent=0 // pred_check_branch
    %25 = sbr.rel (0) target = $region21
  $region20: #{lstm_forward.1} parent=0 // pred_region
    _
  $region21: #{lstm_forward.1} parent=0 // pred_fallthru
    _
  // Predicated region
  $region22: #{lstm_forward.1} parent=0 // pred_check
    _
  $region23: #{lstm_forward.1} parent=0 // pred_check_branch
    %27 = sbr.rel (0) target = $region25
  $region24: #{lstm_forward.1} parent=0 // pred_region
    _
  $region25: #{lstm_forward.1} parent=0 // pred_fallthru
    _
  // Predicated region
  $region26: #{lstm_forward.1} parent=0 // pred_check
    _
  $region27: #{lstm_forward.1} parent=0 // pred_check_branch
    %29 = sbr.rel (0) target = $region29
  $region28: #{lstm_forward.1} parent=0 // pred_region
    _
  $region29: #{lstm_forward.1} parent=0 // pred_fallthru
    _
  // Predicated region
  $region30: #{lstm_forward.1} parent=0 // pred_check
    _
  $region31: #{lstm_forward.1} parent=0 // pred_check_branch
    %31 = sbr.rel (0) target = $region33
  $region32: #{lstm_forward.1} parent=0 // pred_region
    _
  $region33: #{lstm_forward.1} parent=0 // pred_fallthru
    _
  // Predicated region
  $region34: #{lstm_forward.1} parent=0 // pred_check
    _
  $region35: #{lstm_forward.1} parent=0 // pred_check_branch
    %33 = sbr.rel (0) target = $region37
  $region36: #{lstm_forward.1} parent=0 // pred_region
    _
  $region37: #{lstm_forward.1} parent=0 // pred_fallthru
    _
  %v35 = vld [vmem:[%s2] sm:$0xf]
  %v36 = vld [vmem:[%s2 + $0x4] sm:$0xf]
  %v37 = vld [vmem:[%s2 + $0x8] sm:$0xf]
  %v38 = vld [vmem:[%s2 + $0xc] sm:$0xf]
  %v39 = vld [vmem:[%s4] sm:$0xf]
  %v40 = vld [vmem:[%s4 + $0x4] sm:$0xf]
  %v41 = vld [vmem:[%s4 + $0x8] sm:$0xf]
  %v42 = vld [vmem:[%s4 + $0xc] sm:$0xf]
  %v43 = vld [vmem:[%s5] sm:$0xf]
  %v44 = vld [vmem:[%s5 + $0x4] sm:$0xf]
  %v45 = vld [vmem:[%s5 + $0x8] sm:$0xf]
  %v46 = vld [vmem:[%s5 + $0xc] sm:$0xf]
  %v47 = vld [vmem:[%s6] sm:$0x1]
  %v48 = vld [vmem:[%s0] sm:$0xf]
  %v49 = vld [vmem:[%s0 + $0x4] sm:$0xf]
  %v50 = vld [vmem:[%s0 + $0x8] sm:$0xf]
  %v51 = vld [vmem:[%s0 + $0xc] sm:$0xf]
  %v52 = vld [vmem:[%s0 + $0x10] sm:$0xf]
  %v53 = vld [vmem:[%s0 + $0x14] sm:$0xf]
  %v54 = vld [vmem:[%s0 + $0x18] sm:$0xf]
  %v55 = vld [vmem:[%s0 + $0x1c] sm:$0xf]
  %v56 = vld [vmem:[%s1] sm:$0xf]
  %v57 = vld [vmem:[%s1 + $0x4] sm:$0xf]
  %v58 = vld [vmem:[%s3] sm:$0x1]
  %v60 = vperm.slane %v58, 0
  %v70 = vunpack.c.l.b16 %v48
  %v71 = vunpack.c.l.b16 %v49
  %v72 = vunpack.c.l.b16 %v50
  %v73 = vunpack.c.l.b16 %v51
  %v74 = vunpack.c.l.b16 %v52
  %v75 = vunpack.c.l.b16 %v53
  %v76 = vunpack.c.l.b16 %v54
  %v77 = vunpack.c.l.b16 %v55
  %v78 = vpack.c.b16 %v71, %v70
  %v79 = vpack.c.b16 %v73, %v72
  %v80 = vpack.c.b16 %v75, %v74
  %v81 = vpack.c.b16 %v77, %v76
  %v84 = vunpack.c.l.b16 %v56
  %v85 = vunpack.c.l.b16 %v57
  %v86 = vpack.c.b16 %v85, %v84
  %vm88 = vcmask 130048
  %v90 = vsel %vm88, %v78, 0
  %v93 = vsel %vm88, %v79, 0
  %v96 = vsel %vm88, %v80, 0
  %v99 = vsel %vm88, %v81, 0
  %101 = vmatpush.bf16.msra.mxu0 0
  %102 = vmatpush.bf16.msra.mxu0 0
  %103 = vmatpush.bf16.msra.mxu0 0
  %104 = vmatpush.bf16.msra.mxu0 0
  %105 = vmatpush.bf16.msra.mxu0 0
  %106 = vmatpush.bf16.msra.mxu0 0
  %107 = vmatpush.bf16.msra.mxu0 0
  %108 = vmatpush.bf16.msra.mxu0 %v86
  %109 = vmatmul.bf16.gmra.mxu0 %v90
  %v110 = vpop.f32.mrf.mxu0
  %v111 = vadd.f32 %v60, %v110
  %v112 = vpop.f32.mrf.mxu0
  %v113 = vadd.f32 %v60, %v112
  %114 = vmatmul.bf16.gmra.mxu0 %v93
  %v115 = vpop.f32.mrf.mxu0
  %v116 = vadd.f32 %v60, %v115
  %v117 = vpop.f32.mrf.mxu0
  %v118 = vadd.f32 %v60, %v117
  %119 = vmatmul.bf16.gmra.mxu0 %v96
  %v120 = vpop.f32.mrf.mxu0
  %v121 = vadd.f32 %v60, %v120
  %v122 = vpop.f32.mrf.mxu0
  %v123 = vadd.f32 %v60, %v122
  %124 = vmatmul.bf16.gmra.mxu0 %v99
  %v125 = vpop.f32.mrf.mxu0
  %v126 = vadd.f32 %v60, %v125
  %v127 = vpop.f32.mrf.mxu0
  %v128 = vadd.f32 %v60, %v127
  %129 = vdwg.mxu0
  %v134 = vunpack.c.l.b16 %v35
  %v135 = vunpack.c.l.b16 %v36
  %v136 = vunpack.c.l.b16 %v37
  %v137 = vunpack.c.l.b16 %v38
  %v138 = vpack.c.b16 %v135, %v134
  %v139 = vpack.c.b16 %v137, %v136
  %vm142 = vcmask 261120
  %v144 = vsel %vm142, 0, 0
  %146 = vmatpush.bf16.msra.mxu0 0
  %147 = vmatpush.bf16.msra.mxu0 0
  %148 = vmatpush.bf16.msra.mxu0 0
  %149 = vmatpush.bf16.msra.mxu0 0
  %150 = vmatpush.bf16.msra.mxu0 0
  %151 = vmatpush.bf16.msra.mxu0 0
  %152 = vmatpush.bf16.msra.mxu0 %v139
  %153 = vmatpush.bf16.msra.mxu0 %v138
  %154 = vmatmul.bf16.gmra.mxu0 %v144
  %v155 = vpop.f32.mrf.mxu0
  %v156 = vadd.f32 0.0, %v155
  %v157 = vpop.f32.mrf.mxu0
  %158 = vdwg.mxu0
  %v159 = vadd.f32 %v111, %v156
  %v160 = vxor.u32 %v159, 2147483648
  %v161 = vmul.f32 %v160, 1.442695
  %v162 = vpow.pop %v161
  %v163 = vadd.f32 %v162, 1.0
  %v164 = vrcp.pop %v163
  %v165 = vmul.f32 %v163, %v164
  %v166 = vsub.f32 1.0, %v165
  %v167 = vmul.f32 %v164, %v166
  %v168 = vadd.f32 %v164, %v167
  %vm169 = vweird.f32 %v163
  %vm170 = vweird.f32 %v164
  %vm171 = vmor %vm169, %vm170
  %v172 = vsel %vm171, %v164, %v168
  %v173 = vand.u32 2147483647, %v163
  %vm174 = vcmp.eq.f32.partialorder %v173, 8.507059e+37
  %v175 = vand.u32 %v163, 2147483648
  %v176 = vor.u32 1.1754944e-38, %v175
  %v177 = vsel %vm174, %v176, %v172
  %v178 = vmul.f32 1.0, %v177
  %v179 = vtanh.pop %v159
  %v180 = vmul.f32 %v178, 0.0
  %182 = vrot.lane.b32.xlu0 %v179, 32
  %v183 = vpop.permute.xlu0 %182
  %v185 = vmul.f32 %v178, %v183
  %187 = vrot.lane.b32.xlu0 %v185, 32
  %v188 = vpop.permute.xlu0 %187
  %v190 = vadd.f32 %v180, %v188
  %v191 = vtanh.pop %v190
  %193 = vrot.lane.b32.xlu0 %v191, 32
  %v194 = vpop.permute.xlu0 %193
  %v196 = vmul.f32 %v178, %v194
  %v197 = vpack.c.bf16 %v196, %v196
  %199 = vrot.lane.b32.xlu0 %v197, 64
  %v200 = vpop.permute.xlu0 %199
  %v202 = vsel %vm142, %v200, 0
  %204 = vmatpush.bf16.msra.mxu0 0
  %205 = vmatpush.bf16.msra.mxu0 0
  %206 = vmatpush.bf16.msra.mxu0 0
  %207 = vmatpush.bf16.msra.mxu0 0
  %208 = vmatpush.bf16.msra.mxu0 0
  %209 = vmatpush.bf16.msra.mxu0 0
  %210 = vmatpush.bf16.msra.mxu0 %v139
  %211 = vmatpush.bf16.msra.mxu0 %v138
  %212 = vmatmul.bf16.gmra.mxu0 %v202
  %v213 = vpop.f32.mrf.mxu0
  %v214 = vadd.f32 0.0, %v213
  %v215 = vpop.f32.mrf.mxu0
  %216 = vdwg.mxu0
  %v217 = vadd.f32 %v113, %v214
  %v218 = vxor.u32 %v217, 2147483648
  %v219 = vmul.f32 %v218, 1.442695
  %v220 = vpow.pop %v219
  %v221 = vadd.f32 %v220, 1.0
  %v222 = vrcp.pop %v221
  %v223 = vmul.f32 %v221, %v222
  %v224 = vsub.f32 1.0, %v223
  %v225 = vmul.f32 %v222, %v224
  %v226 = vadd.f32 %v222, %v225
  %vm227 = vweird.f32 %v221
  %vm228 = vweird.f32 %v222
  %vm229 = vmor %vm227, %vm228
  %v230 = vsel %vm229, %v222, %v226
  %v231 = vand.u32 2147483647, %v221
  %vm232 = vcmp.eq.f32.partialorder %v231, 8.507059e+37
  %v233 = vand.u32 %v221, 2147483648
  %v234 = vor.u32 1.1754944e-38, %v233
  %v235 = vsel %vm232, %v234, %v230
  %v236 = vmul.f32 1.0, %v235
  %v237 = vtanh.pop %v217
  %v238 = vmul.f32 %v236, %v190
  %240 = vrot.lane.b32.xlu0 %v237, 32
  %v241 = vpop.permute.xlu0 %240
  %v243 = vmul.f32 %v236, %v241
  %245 = vrot.lane.b32.xlu0 %v243, 32
  %v246 = vpop.permute.xlu0 %245
  %v248 = vadd.f32 %v238, %v246
  %v249 = vtanh.pop %v248
  %251 = vrot.lane.b32.xlu0 %v249, 32
  %v252 = vpop.permute.xlu0 %251
  %v254 = vmul.f32 %v236, %v252
  %v259 = vunpack.c.l.b16 %v43
  %v260 = vunpack.c.l.b16 %v44
  %v261 = vunpack.c.l.b16 %v45
  %v262 = vunpack.c.l.b16 %v46
  %v263 = vpack.c.b16 %v260, %v259
  %v264 = vpack.c.b16 %v262, %v261
  %267 = vmatpush.bf16.msra.mxu0 0
  %268 = vmatpush.bf16.msra.mxu0 0
  %269 = vmatpush.bf16.msra.mxu0 0
  %270 = vmatpush.bf16.msra.mxu0 0
  %271 = vmatpush.bf16.msra.mxu0 0
  %272 = vmatpush.bf16.msra.mxu0 0
  %273 = vmatpush.bf16.msra.mxu0 %v264
  %274 = vmatpush.bf16.msra.mxu0 %v263
  %275 = vmatmul.bf16.gmra.mxu0 %v144
  %v276 = vpop.f32.mrf.mxu0
  %v277 = vadd.f32 0.0, %v276
  %v278 = vpop.f32.mrf.mxu0
  %279 = vdwg.mxu0
  %v284 = vunpack.c.l.b16 %v39
  %v285 = vunpack.c.l.b16 %v40
  %v286 = vunpack.c.l.b16 %v41
  %v287 = vunpack.c.l.b16 %v42
  %v288 = vpack.c.b16 %v285, %v284
  %v289 = vpack.c.b16 %v287, %v286
  %292 = vmatpush.bf16.msra.mxu0 0
  %293 = vmatpush.bf16.msra.mxu0 0
  %294 = vmatpush.bf16.msra.mxu0 0
  %295 = vmatpush.bf16.msra.mxu0 0
  %296 = vmatpush.bf16.msra.mxu0 0
  %297 = vmatpush.bf16.msra.mxu0 0
  %298 = vmatpush.bf16.msra.mxu0 %v289
  %299 = vmatpush.bf16.msra.mxu0 %v288
  %300 = vmatmul.bf16.gmra.mxu0 %v202
  %v301 = vpop.f32.mrf.mxu0
  %v302 = vadd.f32 %v277, %v301
  %v303 = vpop.f32.mrf.mxu0
  %304 = vdwg.mxu0
  %v306 = vperm.slane %v47, 0
  %v308 = vadd.f32 %v302, %v306
  %v309 = vxor.u32 %v308, 2147483648
  %v310 = vmul.f32 %v309, 1.442695
  %v311 = vpow.pop %v310
  %v312 = vadd.f32 %v311, 1.0
  %v313 = vrcp.pop %v312
  %v314 = vmul.f32 %v312, %v313
  %v315 = vsub.f32 1.0, %v314
  %v316 = vmul.f32 %v313, %v315
  %v317 = vadd.f32 %v313, %v316
  %vm318 = vweird.f32 %v312
  %vm319 = vweird.f32 %v313
  %vm320 = vmor %vm318, %vm319
  %v321 = vsel %vm320, %v313, %v317
  %v322 = vand.u32 2147483647, %v312
  %vm323 = vcmp.eq.f32.partialorder %v322, 8.507059e+37
  %v324 = vand.u32 %v312, 2147483648
  %v325 = vor.u32 1.1754944e-38, %v324
  %v326 = vsel %vm323, %v325, %v321
  %v327 = vmul.f32 1.0, %v326
  %v328 = vtanh.pop %v308
  %v329 = vmul.f32 %v327, 0.0
  %331 = vrot.lane.b32.xlu0 %v328, 32
  %v332 = vpop.permute.xlu0 %331
  %v334 = vmul.f32 %v327, %v332
  %336 = vrot.lane.b32.xlu0 %v334, 32
  %v337 = vpop.permute.xlu0 %336
  %v339 = vadd.f32 %v329, %v337
  %v340 = vtanh.pop %v339
  %342 = vrot.lane.b32.xlu0 %v340, 32
  %v343 = vpop.permute.xlu0 %342
  %v345 = vmul.f32 %v327, %v343
  %v346 = vpack.c.bf16 %v254, %v254
  %348 = vrot.lane.b32.xlu0 %v346, 64
  %v349 = vpop.permute.xlu0 %348
  %v351 = vsel %vm142, %v349, 0
  %353 = vmatpush.bf16.msra.mxu0 0
  %354 = vmatpush.bf16.msra.mxu0 0
  %355 = vmatpush.bf16.msra.mxu0 0
  %356 = vmatpush.bf16.msra.mxu0 0
  %357 = vmatpush.bf16.msra.mxu0 0
  %358 = vmatpush.bf16.msra.mxu0 0
  %359 = vmatpush.bf16.msra.mxu0 %v139
  %360 = vmatpush.bf16.msra.mxu0 %v138
  %361 = vmatmul.bf16.gmra.mxu0 %v351
  %v362 = vpop.f32.mrf.mxu0
  %v363 = vadd.f32 0.0, %v362
  %v364 = vpop.f32.mrf.mxu0
  %365 = vdwg.mxu0
  %v366 = vadd.f32 %v116, %v363
  %v367 = vxor.u32 %v366, 2147483648
  %v368 = vmul.f32 %v367, 1.442695
  %v369 = vpow.pop %v368
  %v370 = vadd.f32 %v369, 1.0
  %v371 = vrcp.pop %v370
  %v372 = vmul.f32 %v370, %v371
  %v373 = vsub.f32 1.0, %v372
  %v374 = vmul.f32 %v371, %v373
  %v375 = vadd.f32 %v371, %v374
  %vm376 = vweird.f32 %v370
  %vm377 = vweird.f32 %v371
  %vm378 = vmor %vm376, %vm377
  %v379 = vsel %vm378, %v371, %v375
  %v380 = vand.u32 2147483647, %v370
  %vm381 = vcmp.eq.f32.partialorder %v380, 8.507059e+37
  %v382 = vand.u32 %v370, 2147483648
  %v383 = vor.u32 1.1754944e-38, %v382
  %v384 = vsel %vm381, %v383, %v379
  %v385 = vmul.f32 1.0, %v384
  %v386 = vtanh.pop %v366
  %v387 = vmul.f32 %v385, %v248
  %389 = vrot.lane.b32.xlu0 %v386, 32
  %v390 = vpop.permute.xlu0 %389
  %v392 = vmul.f32 %v385, %v390
  %394 = vrot.lane.b32.xlu0 %v392, 32
  %v395 = vpop.permute.xlu0 %394
  %v397 = vadd.f32 %v387, %v395
  %v398 = vtanh.pop %v397
  %400 = vrot.lane.b32.xlu0 %v398, 32
  %v401 = vpop.permute.xlu0 %400
  %v403 = vmul.f32 %v385, %v401
  %v404 = vpack.c.bf16 %v345, %v345
  %406 = vrot.lane.b32.xlu0 %v404, 64
  %v407 = vpop.permute.xlu0 %406
  %v409 = vsel %vm142, %v407, 0
  %411 = vmatpush.bf16.msra.mxu0 0
  %412 = vmatpush.bf16.msra.mxu0 0
  %413 = vmatpush.bf16.msra.mxu0 0
  %414 = vmatpush.bf16.msra.mxu0 0
  %415 = vmatpush.bf16.msra.mxu0 0
  %416 = vmatpush.bf16.msra.mxu0 0
  %417 = vmatpush.bf16.msra.mxu0 %v264
  %418 = vmatpush.bf16.msra.mxu0 %v263
  %419 = vmatmul.bf16.gmra.mxu0 %v409
  %v420 = vpop.f32.mrf.mxu0
  %v421 = vadd.f32 0.0, %v420
  %v422 = vpop.f32.mrf.mxu0
  %423 = vdwg.mxu0
  %424 = vmatpush.bf16.msra.mxu0 0
  %425 = vmatpush.bf16.msra.mxu0 0
  %426 = vmatpush.bf16.msra.mxu0 0
  %427 = vmatpush.bf16.msra.mxu0 0
  %428 = vmatpush.bf16.msra.mxu0 0
  %429 = vmatpush.bf16.msra.mxu0 0
  %430 = vmatpush.bf16.msra.mxu0 %v289
  %431 = vmatpush.bf16.msra.mxu0 %v288
  %432 = vmatmul.bf16.gmra.mxu0 %v351
  %v433 = vpop.f32.mrf.mxu0
  %v434 = vadd.f32 %v421, %v433
  %v435 = vpop.f32.mrf.mxu0
  %436 = vdwg.mxu0
  %v437 = vadd.f32 %v434, %v306
  %v438 = vxor.u32 %v437, 2147483648
  %v439 = vmul.f32 %v438, 1.442695
  %v440 = vpow.pop %v439
  %v441 = vadd.f32 %v440, 1.0
  %v442 = vrcp.pop %v441
  %v443 = vmul.f32 %v441, %v442
  %v444 = vsub.f32 1.0, %v443
  %v445 = vmul.f32 %v442, %v444
  %v446 = vadd.f32 %v442, %v445
  %vm447 = vweird.f32 %v441
  %vm448 = vweird.f32 %v442
  %vm449 = vmor %vm447, %vm448
  %v450 = vsel %vm449, %v442, %v446
  %v451 = vand.u32 2147483647, %v441
  %vm452 = vcmp.eq.f32.partialorder %v451, 8.507059e+37
  %v453 = vand.u32 %v441, 2147483648
  %v454 = vor.u32 1.1754944e-38, %v453
  %v455 = vsel %vm452, %v454, %v450
  %v456 = vmul.f32 1.0, %v455
  %v457 = vtanh.pop %v437
  %v458 = vmul.f32 %v456, %v339
  %460 = vrot.lane.b32.xlu0 %v457, 32
  %v461 = vpop.permute.xlu0 %460
  %v463 = vmul.f32 %v456, %v461
  %465 = vrot.lane.b32.xlu0 %v463, 32
  %v466 = vpop.permute.xlu0 %465
  %v468 = vadd.f32 %v458, %v466
  %v469 = vtanh.pop %v468
  %471 = vrot.lane.b32.xlu0 %v469, 32
  %v472 = vpop.permute.xlu0 %471
  %v474 = vmul.f32 %v456, %v472
  %v475 = vpack.c.bf16 %v403, %v403
  %477 = vrot.lane.b32.xlu0 %v475, 64
  %v478 = vpop.permute.xlu0 %477
  %v480 = vsel %vm142, %v478, 0
  %482 = vmatpush.bf16.msra.mxu0 0
  %483 = vmatpush.bf16.msra.mxu0 0
  %484 = vmatpush.bf16.msra.mxu0 0
  %485 = vmatpush.bf16.msra.mxu0 0
  %486 = vmatpush.bf16.msra.mxu0 0
  %487 = vmatpush.bf16.msra.mxu0 0
  %488 = vmatpush.bf16.msra.mxu0 %v139
  %489 = vmatpush.bf16.msra.mxu0 %v138
  %490 = vmatmul.bf16.gmra.mxu0 %v480
  %v491 = vpop.f32.mrf.mxu0
  %v492 = vadd.f32 0.0, %v491
  %v493 = vpop.f32.mrf.mxu0
  %494 = vdwg.mxu0
  %v495 = vadd.f32 %v118, %v492
  %v496 = vxor.u32 %v495, 2147483648
  %v497 = vmul.f32 %v496, 1.442695
  %v498 = vpow.pop %v497
  %v499 = vadd.f32 %v498, 1.0
  %v500 = vrcp.pop %v499
  %v501 = vmul.f32 %v499, %v500
  %v502 = vsub.f32 1.0, %v501
  %v503 = vmul.f32 %v500, %v502
  %v504 = vadd.f32 %v500, %v503
  %vm505 = vweird.f32 %v499
  %vm506 = vweird.f32 %v500
  %vm507 = vmor %vm505, %vm506
  %v508 = vsel %vm507, %v500, %v504
  %v509 = vand.u32 2147483647, %v499
  %vm510 = vcmp.eq.f32.partialorder %v509, 8.507059e+37
  %v511 = vand.u32 %v499, 2147483648
  %v512 = vor.u32 1.1754944e-38, %v511
  %v513 = vsel %vm510, %v512, %v508
  %v514 = vmul.f32 1.0, %v513
  %v515 = vtanh.pop %v495
  %v516 = vmul.f32 %v514, %v397
  %518 = vrot.lane.b32.xlu0 %v515, 32
  %v519 = vpop.permute.xlu0 %518
  %v521 = vmul.f32 %v514, %v519
  %523 = vrot.lane.b32.xlu0 %v521, 32
  %v524 = vpop.permute.xlu0 %523
  %v526 = vadd.f32 %v516, %v524
  %v527 = vtanh.pop %v526
  %529 = vrot.lane.b32.xlu0 %v527, 32
  %v530 = vpop.permute.xlu0 %529
  %v532 = vmul.f32 %v514, %v530
  %v533 = vpack.c.bf16 %v474, %v474
  %535 = vrot.lane.b32.xlu0 %v533, 64
  %v536 = vpop.permute.xlu0 %535
  %v538 = vsel %vm142, %v536, 0
  %540 = vmatpush.bf16.msra.mxu0 0
  %541 = vmatpush.bf16.msra.mxu0 0
  %542 = vmatpush.bf16.msra.mxu0 0
  %543 = vmatpush.bf16.msra.mxu0 0
  %544 = vmatpush.bf16.msra.mxu0 0
  %545 = vmatpush.bf16.msra.mxu0 0
  %546 = vmatpush.bf16.msra.mxu0 %v264
  %547 = vmatpush.bf16.msra.mxu0 %v263
  %548 = vmatmul.bf16.gmra.mxu0 %v538
  %v549 = vpop.f32.mrf.mxu0
  %v550 = vadd.f32 0.0, %v549
  %v551 = vpop.f32.mrf.mxu0
  %552 = vdwg.mxu0
  %553 = vmatpush.bf16.msra.mxu0 0
  %554 = vmatpush.bf16.msra.mxu0 0
  %555 = vmatpush.bf16.msra.mxu0 0
  %556 = vmatpush.bf16.msra.mxu0 0
  %557 = vmatpush.bf16.msra.mxu0 0
  %558 = vmatpush.bf16.msra.mxu0 0
  %559 = vmatpush.bf16.msra.mxu0 %v289
  %560 = vmatpush.bf16.msra.mxu0 %v288
  %561 = vmatmul.bf16.gmra.mxu0 %v480
  %v562 = vpop.f32.mrf.mxu0
  %v563 = vadd.f32 %v550, %v562
  %v564 = vpop.f32.mrf.mxu0
  %565 = vdwg.mxu0
  %v566 = vadd.f32 %v563, %v306
  %v567 = vxor.u32 %v566, 2147483648
  %v568 = vmul.f32 %v567, 1.442695
  %v569 = vpow.pop %v568
  %v570 = vadd.f32 %v569, 1.0
  %v571 = vrcp.pop %v570
  %v572 = vmul.f32 %v570, %v571
  %v573 = vsub.f32 1.0, %v572
  %v574 = vmul.f32 %v571, %v573
  %v575 = vadd.f32 %v571, %v574
  %vm576 = vweird.f32 %v570
  %vm577 = vweird.f32 %v571
  %vm578 = vmor %vm576, %vm577
  %v579 = vsel %vm578, %v571, %v575
  %v580 = vand.u32 2147483647, %v570
  %vm581 = vcmp.eq.f32.partialorder %v580, 8.507059e+37
  %v582 = vand.u32 %v570, 2147483648
  %v583 = vor.u32 1.1754944e-38, %v582
  %v584 = vsel %vm581, %v583, %v579
  %v585 = vmul.f32 1.0, %v584
  %v586 = vtanh.pop %v566
  %v587 = vmul.f32 %v585, %v468
  %589 = vrot.lane.b32.xlu0 %v586, 32
  %v590 = vpop.permute.xlu0 %589
  %v592 = vmul.f32 %v585, %v590
  %594 = vrot.lane.b32.xlu0 %v592, 32
  %v595 = vpop.permute.xlu0 %594
  %v597 = vadd.f32 %v587, %v595
  %v598 = vtanh.pop %v597
  %600 = vrot.lane.b32.xlu0 %v598, 32
  %v601 = vpop.permute.xlu0 %600
  %v603 = vmul.f32 %v585, %v601
  %v604 = vpack.c.bf16 %v532, %v532
  %606 = vrot.lane.b32.xlu0 %v604, 64
  %v607 = vpop.permute.xlu0 %606
  %v609 = vsel %vm142, %v607, 0
  %611 = vmatpush.bf16.msra.mxu0 0
  %612 = vmatpush.bf16.msra.mxu0 0
  %613 = vmatpush.bf16.msra.mxu0 0
  %614 = vmatpush.bf16.msra.mxu0 0
  %615 = vmatpush.bf16.msra.mxu0 0
  %616 = vmatpush.bf16.msra.mxu0 0
  %617 = vmatpush.bf16.msra.mxu0 %v139
  %618 = vmatpush.bf16.msra.mxu0 %v138
  %619 = vmatmul.bf16.gmra.mxu0 %v609
  %v620 = vpop.f32.mrf.mxu0
  %v621 = vadd.f32 0.0, %v620
  %v622 = vpop.f32.mrf.mxu0
  %623 = vdwg.mxu0
  %v624 = vadd.f32 %v121, %v621
  %v625 = vxor.u32 %v624, 2147483648
  %v626 = vmul.f32 %v625, 1.442695
  %v627 = vpow.pop %v626
  %v628 = vadd.f32 %v627, 1.0
  %v629 = vrcp.pop %v628
  %v630 = vmul.f32 %v628, %v629
  %v631 = vsub.f32 1.0, %v630
  %v632 = vmul.f32 %v629, %v631
  %v633 = vadd.f32 %v629, %v632
  %vm634 = vweird.f32 %v628
  %vm635 = vweird.f32 %v629
  %vm636 = vmor %vm634, %vm635
  %v637 = vsel %vm636, %v629, %v633
  %v638 = vand.u32 2147483647, %v628
  %vm639 = vcmp.eq.f32.partialorder %v638, 8.507059e+37
  %v640 = vand.u32 %v628, 2147483648
  %v641 = vor.u32 1.1754944e-38, %v640
  %v642 = vsel %vm639, %v641, %v637
  %v643 = vmul.f32 1.0, %v642
  %v644 = vtanh.pop %v624
  %v645 = vmul.f32 %v643, %v526
  %647 = vrot.lane.b32.xlu0 %v644, 32
  %v648 = vpop.permute.xlu0 %647
  %v650 = vmul.f32 %v643, %v648
  %652 = vrot.lane.b32.xlu0 %v650, 32
  %v653 = vpop.permute.xlu0 %652
  %v655 = vadd.f32 %v645, %v653
  %v656 = vtanh.pop %v655
  %658 = vrot.lane.b32.xlu0 %v656, 32
  %v659 = vpop.permute.xlu0 %658
  %v661 = vmul.f32 %v643, %v659
  %v662 = vpack.c.bf16 %v603, %v603
  %664 = vrot.lane.b32.xlu0 %v662, 64
  %v665 = vpop.permute.xlu0 %664
  %v667 = vsel %vm142, %v665, 0
  %669 = vmatpush.bf16.msra.mxu0 0
  %670 = vmatpush.bf16.msra.mxu0 0
  %671 = vmatpush.bf16.msra.mxu0 0
  %672 = vmatpush.bf16.msra.mxu0 0
  %673 = vmatpush.bf16.msra.mxu0 0
  %674 = vmatpush.bf16.msra.mxu0 0
  %675 = vmatpush.bf16.msra.mxu0 %v264
  %676 = vmatpush.bf16.msra.mxu0 %v263
  %677 = vmatmul.bf16.gmra.mxu0 %v667
  %v678 = vpop.f32.mrf.mxu0
  %v679 = vadd.f32 0.0, %v678
  %v680 = vpop.f32.mrf.mxu0
  %681 = vdwg.mxu0
  %682 = vmatpush.bf16.msra.mxu0 0
  %683 = vmatpush.bf16.msra.mxu0 0
  %684 = vmatpush.bf16.msra.mxu0 0
  %685 = vmatpush.bf16.msra.mxu0 0
  %686 = vmatpush.bf16.msra.mxu0 0
  %687 = vmatpush.bf16.msra.mxu0 0
  %688 = vmatpush.bf16.msra.mxu0 %v289
  %689 = vmatpush.bf16.msra.mxu0 %v288
  %690 = vmatmul.bf16.gmra.mxu0 %v609
  %v691 = vpop.f32.mrf.mxu0
  %v692 = vadd.f32 %v679, %v691
  %v693 = vpop.f32.mrf.mxu0
  %694 = vdwg.mxu0
  %v695 = vadd.f32 %v692, %v306
  %v696 = vxor.u32 %v695, 2147483648
  %v697 = vmul.f32 %v696, 1.442695
  %v698 = vpow.pop %v697
  %v699 = vadd.f32 %v698, 1.0
  %v700 = vrcp.pop %v699
  %v701 = vmul.f32 %v699, %v700
  %v702 = vsub.f32 1.0, %v701
  %v703 = vmul.f32 %v700, %v702
  %v704 = vadd.f32 %v700, %v703
  %vm705 = vweird.f32 %v699
  %vm706 = vweird.f32 %v700
  %vm707 = vmor %vm705, %vm706
  %v708 = vsel %vm707, %v700, %v704
  %v709 = vand.u32 2147483647, %v699
  %vm710 = vcmp.eq.f32.partialorder %v709, 8.507059e+37
  %v711 = vand.u32 %v699, 2147483648
  %v712 = vor.u32 1.1754944e-38, %v711
  %v713 = vsel %vm710, %v712, %v708
  %v714 = vmul.f32 1.0, %v713
  %v715 = vtanh.pop %v695
  %v716 = vmul.f32 %v714, %v597
  %718 = vrot.lane.b32.xlu0 %v715, 32
  %v719 = vpop.permute.xlu0 %718
  %v721 = vmul.f32 %v714, %v719
  %723 = vrot.lane.b32.xlu0 %v721, 32
  %v724 = vpop.permute.xlu0 %723
  %v726 = vadd.f32 %v716, %v724
  %v727 = vtanh.pop %v726
  %729 = vrot.lane.b32.xlu0 %v727, 32
  %v730 = vpop.permute.xlu0 %729
  %v732 = vmul.f32 %v714, %v730
  %v733 = vpack.c.bf16 %v661, %v661
  %735 = vrot.lane.b32.xlu0 %v733, 64
  %v736 = vpop.permute.xlu0 %735
  %v738 = vsel %vm142, %v736, 0
  %740 = vmatpush.bf16.msra.mxu0 0
  %741 = vmatpush.bf16.msra.mxu0 0
  %742 = vmatpush.bf16.msra.mxu0 0
  %743 = vmatpush.bf16.msra.mxu0 0
  %744 = vmatpush.bf16.msra.mxu0 0
  %745 = vmatpush.bf16.msra.mxu0 0
  %746 = vmatpush.bf16.msra.mxu0 %v139
  %747 = vmatpush.bf16.msra.mxu0 %v138
  %748 = vmatmul.bf16.gmra.mxu0 %v738
  %v749 = vpop.f32.mrf.mxu0
  %v750 = vadd.f32 0.0, %v749
  %v751 = vpop.f32.mrf.mxu0
  %752 = vdwg.mxu0
  %v753 = vadd.f32 %v123, %v750
  %v754 = vxor.u32 %v753, 2147483648
  %v755 = vmul.f32 %v754, 1.442695
  %v756 = vpow.pop %v755
  %v757 = vadd.f32 %v756, 1.0
  %v758 = vrcp.pop %v757
  %v759 = vmul.f32 %v757, %v758
  %v760 = vsub.f32 1.0, %v759
  %v761 = vmul.f32 %v758, %v760
  %v762 = vadd.f32 %v758, %v761
  %vm763 = vweird.f32 %v757
  %vm764 = vweird.f32 %v758
  %vm765 = vmor %vm763, %vm764
  %v766 = vsel %vm765, %v758, %v762
  %v767 = vand.u32 2147483647, %v757
  %vm768 = vcmp.eq.f32.partialorder %v767, 8.507059e+37
  %v769 = vand.u32 %v757, 2147483648
  %v770 = vor.u32 1.1754944e-38, %v769
  %v771 = vsel %vm768, %v770, %v766
  %v772 = vmul.f32 1.0, %v771
  %v773 = vtanh.pop %v753
  %v774 = vmul.f32 %v772, %v655
  %776 = vrot.lane.b32.xlu0 %v773, 32
  %v777 = vpop.permute.xlu0 %776
  %v779 = vmul.f32 %v772, %v777
  %781 = vrot.lane.b32.xlu0 %v779, 32
  %v782 = vpop.permute.xlu0 %781
  %v784 = vadd.f32 %v774, %v782
  %v785 = vtanh.pop %v784
  %787 = vrot.lane.b32.xlu0 %v785, 32
  %v788 = vpop.permute.xlu0 %787
  %v790 = vmul.f32 %v772, %v788
  %v791 = vpack.c.bf16 %v732, %v732
  %793 = vrot.lane.b32.xlu0 %v791, 64
  %v794 = vpop.permute.xlu0 %793
  %v796 = vsel %vm142, %v794, 0
  %798 = vmatpush.bf16.msra.mxu0 0
  %799 = vmatpush.bf16.msra.mxu0 0
  %800 = vmatpush.bf16.msra.mxu0 0
  %801 = vmatpush.bf16.msra.mxu0 0
  %802 = vmatpush.bf16.msra.mxu0 0
  %803 = vmatpush.bf16.msra.mxu0 0
  %804 = vmatpush.bf16.msra.mxu0 %v264
  %805 = vmatpush.bf16.msra.mxu0 %v263
  %806 = vmatmul.bf16.gmra.mxu0 %v796
  %v807 = vpop.f32.mrf.mxu0
  %v808 = vadd.f32 0.0, %v807
  %v809 = vpop.f32.mrf.mxu0
  %810 = vdwg.mxu0
  %811 = vmatpush.bf16.msra.mxu0 0
  %812 = vmatpush.bf16.msra.mxu0 0
  %813 = vmatpush.bf16.msra.mxu0 0
  %814 = vmatpush.bf16.msra.mxu0 0
  %815 = vmatpush.bf16.msra.mxu0 0
  %816 = vmatpush.bf16.msra.mxu0 0
  %817 = vmatpush.bf16.msra.mxu0 %v289
  %818 = vmatpush.bf16.msra.mxu0 %v288
  %819 = vmatmul.bf16.gmra.mxu0 %v738
  %v820 = vpop.f32.mrf.mxu0
  %v821 = vadd.f32 %v808, %v820
  %v822 = vpop.f32.mrf.mxu0
  %823 = vdwg.mxu0
  %v824 = vadd.f32 %v821, %v306
  %v825 = vxor.u32 %v824, 2147483648
  %v826 = vmul.f32 %v825, 1.442695
  %v827 = vpow.pop %v826
  %v828 = vadd.f32 %v827, 1.0
  %v829 = vrcp.pop %v828
  %v830 = vmul.f32 %v828, %v829
  %v831 = vsub.f32 1.0, %v830
  %v832 = vmul.f32 %v829, %v831
  %v833 = vadd.f32 %v829, %v832
  %vm834 = vweird.f32 %v828
  %vm835 = vweird.f32 %v829
  %vm836 = vmor %vm834, %vm835
  %v837 = vsel %vm836, %v829, %v833
  %v838 = vand.u32 2147483647, %v828
  %vm839 = vcmp.eq.f32.partialorder %v838, 8.507059e+37
  %v840 = vand.u32 %v828, 2147483648
  %v841 = vor.u32 1.1754944e-38, %v840
  %v842 = vsel %vm839, %v841, %v837
  %v843 = vmul.f32 1.0, %v842
  %v844 = vtanh.pop %v824
  %v845 = vmul.f32 %v843, %v726
  %847 = vrot.lane.b32.xlu0 %v844, 32
  %v848 = vpop.permute.xlu0 %847
  %v850 = vmul.f32 %v843, %v848
  %852 = vrot.lane.b32.xlu0 %v850, 32
  %v853 = vpop.permute.xlu0 %852
  %v855 = vadd.f32 %v845, %v853
  %v856 = vtanh.pop %v855
  %858 = vrot.lane.b32.xlu0 %v856, 32
  %v859 = vpop.permute.xlu0 %858
  %v861 = vmul.f32 %v843, %v859
  %v862 = vpack.c.bf16 %v790, %v790
  %864 = vrot.lane.b32.xlu0 %v862, 64
  %v865 = vpop.permute.xlu0 %864
  %v867 = vsel %vm142, %v865, 0
  %869 = vmatpush.bf16.msra.mxu0 0
  %870 = vmatpush.bf16.msra.mxu0 0
  %871 = vmatpush.bf16.msra.mxu0 0
  %872 = vmatpush.bf16.msra.mxu0 0
  %873 = vmatpush.bf16.msra.mxu0 0
  %874 = vmatpush.bf16.msra.mxu0 0
  %875 = vmatpush.bf16.msra.mxu0 %v139
  %876 = vmatpush.bf16.msra.mxu0 %v138
  %877 = vmatmul.bf16.gmra.mxu0 %v867
  %v878 = vpop.f32.mrf.mxu0
  %v879 = vadd.f32 0.0, %v878
  %v880 = vpop.f32.mrf.mxu0
  %881 = vdwg.mxu0
  %v882 = vadd.f32 %v126, %v879
  %v883 = vxor.u32 %v882, 2147483648
  %v884 = vmul.f32 %v883, 1.442695
  %v885 = vpow.pop %v884
  %v886 = vadd.f32 %v885, 1.0
  %v887 = vrcp.pop %v886
  %v888 = vmul.f32 %v886, %v887
  %v889 = vsub.f32 1.0, %v888
  %v890 = vmul.f32 %v887, %v889
  %v891 = vadd.f32 %v887, %v890
  %vm892 = vweird.f32 %v886
  %vm893 = vweird.f32 %v887
  %vm894 = vmor %vm892, %vm893
  %v895 = vsel %vm894, %v887, %v891
  %v896 = vand.u32 2147483647, %v886
  %vm897 = vcmp.eq.f32.partialorder %v896, 8.507059e+37
  %v898 = vand.u32 %v886, 2147483648
  %v899 = vor.u32 1.1754944e-38, %v898
  %v900 = vsel %vm897, %v899, %v895
  %v901 = vmul.f32 1.0, %v900
  %v902 = vtanh.pop %v882
  %v903 = vmul.f32 %v901, %v784
  %905 = vrot.lane.b32.xlu0 %v902, 32
  %v906 = vpop.permute.xlu0 %905
  %v908 = vmul.f32 %v901, %v906
  %910 = vrot.lane.b32.xlu0 %v908, 32
  %v911 = vpop.permute.xlu0 %910
  %v913 = vadd.f32 %v903, %v911
  %v914 = vtanh.pop %v913
  %916 = vrot.lane.b32.xlu0 %v914, 32
  %v917 = vpop.permute.xlu0 %916
  %v919 = vmul.f32 %v901, %v917
  %v920 = vpack.c.bf16 %v861, %v861
  %922 = vrot.lane.b32.xlu0 %v920, 64
  %v923 = vpop.permute.xlu0 %922
  %v925 = vsel %vm142, %v923, 0
  %927 = vmatpush.bf16.msra.mxu0 0
  %928 = vmatpush.bf16.msra.mxu0 0
  %929 = vmatpush.bf16.msra.mxu0 0
  %930 = vmatpush.bf16.msra.mxu0 0
  %931 = vmatpush.bf16.msra.mxu0 0
  %932 = vmatpush.bf16.msra.mxu0 0
  %933 = vmatpush.bf16.msra.mxu0 %v264
  %934 = vmatpush.bf16.msra.mxu0 %v263
  %935 = vmatmul.bf16.gmra.mxu0 %v925
  %v936 = vpop.f32.mrf.mxu0
  %v937 = vadd.f32 0.0, %v936
  %v938 = vpop.f32.mrf.mxu0
  %939 = vdwg.mxu0
  %940 = vmatpush.bf16.msra.mxu0 0
  %941 = vmatpush.bf16.msra.mxu0 0
  %942 = vmatpush.bf16.msra.mxu0 0
  %943 = vmatpush.bf16.msra.mxu0 0
  %944 = vmatpush.bf16.msra.mxu0 0
  %945 = vmatpush.bf16.msra.mxu0 0
  %946 = vmatpush.bf16.msra.mxu0 %v289
  %947 = vmatpush.bf16.msra.mxu0 %v288
  %948 = vmatmul.bf16.gmra.mxu0 %v867
  %v949 = vpop.f32.mrf.mxu0
  %v950 = vadd.f32 %v937, %v949
  %v951 = vpop.f32.mrf.mxu0
  %952 = vdwg.mxu0
  %v953 = vadd.f32 %v950, %v306
  %v954 = vxor.u32 %v953, 2147483648
  %v955 = vmul.f32 %v954, 1.442695
  %v956 = vpow.pop %v955
  %v957 = vadd.f32 %v956, 1.0
  %v958 = vrcp.pop %v957
  %v959 = vmul.f32 %v957, %v958
  %v960 = vsub.f32 1.0, %v959
  %v961 = vmul.f32 %v958, %v960
  %v962 = vadd.f32 %v958, %v961
  %vm963 = vweird.f32 %v957
  %vm964 = vweird.f32 %v958
  %vm965 = vmor %vm963, %vm964
  %v966 = vsel %vm965, %v958, %v962
  %v967 = vand.u32 2147483647, %v957
  %vm968 = vcmp.eq.f32.partialorder %v967, 8.507059e+37
  %v969 = vand.u32 %v957, 2147483648
  %v970 = vor.u32 1.1754944e-38, %v969
  %v971 = vsel %vm968, %v970, %v966
  %v972 = vmul.f32 1.0, %v971
  %v973 = vtanh.pop %v953
  %v974 = vmul.f32 %v972, %v855
  %976 = vrot.lane.b32.xlu0 %v973, 32
  %v977 = vpop.permute.xlu0 %976
  %v979 = vmul.f32 %v972, %v977
  %981 = vrot.lane.b32.xlu0 %v979, 32
  %v982 = vpop.permute.xlu0 %981
  %v984 = vadd.f32 %v974, %v982
  %v985 = vtanh.pop %v984
  %987 = vrot.lane.b32.xlu0 %v985, 32
  %v988 = vpop.permute.xlu0 %987
  %v990 = vmul.f32 %v972, %v988
  %v991 = vpack.c.bf16 %v919, %v919
  %993 = vrot.lane.b32.xlu0 %v991, 64
  %v994 = vpop.permute.xlu0 %993
  %v996 = vsel %vm142, %v994, 0
  %998 = vmatpush.bf16.msra.mxu0 0
  %999 = vmatpush.bf16.msra.mxu0 0
  %1000 = vmatpush.bf16.msra.mxu0 0
  %1001 = vmatpush.bf16.msra.mxu0 0
  %1002 = vmatpush.bf16.msra.mxu0 0
  %1003 = vmatpush.bf16.msra.mxu0 0
  %1004 = vmatpush.bf16.msra.mxu0 %v139
  %1005 = vmatpush.bf16.msra.mxu0 %v138
  %1006 = vmatmul.bf16.gmra.mxu0 %v996
  %v1007 = vpop.f32.mrf.mxu0
  %v1008 = vadd.f32 0.0, %v1007
  %v1009 = vpop.f32.mrf.mxu0
  %1010 = vdwg.mxu0
  %v1011 = vadd.f32 %v128, %v1008
  %v1012 = vxor.u32 %v1011, 2147483648
  %v1013 = vmul.f32 %v1012, 1.442695
  %v1014 = vpow.pop %v1013
  %v1015 = vadd.f32 %v1014, 1.0
  %v1016 = vrcp.pop %v1015
  %v1017 = vmul.f32 %v1015, %v1016
  %v1018 = vsub.f32 1.0, %v1017
  %v1019 = vmul.f32 %v1016, %v1018
  %v1020 = vadd.f32 %v1016, %v1019
  %vm1021 = vweird.f32 %v1015
  %vm1022 = vweird.f32 %v1016
  %vm1023 = vmor %vm1021, %vm1022
  %v1024 = vsel %vm1023, %v1016, %v1020
  %v1025 = vand.u32 2147483647, %v1015
  %vm1026 = vcmp.eq.f32.partialorder %v1025, 8.507059e+37
  %v1027 = vand.u32 %v1015, 2147483648
  %v1028 = vor.u32 1.1754944e-38, %v1027
  %v1029 = vsel %vm1026, %v1028, %v1024
  %v1030 = vmul.f32 1.0, %v1029
  %v1031 = vtanh.pop %v1011
  %v1032 = vmul.f32 %v1030, %v913
  %1034 = vrot.lane.b32.xlu0 %v1031, 32
  %v1035 = vpop.permute.xlu0 %1034
  %v1037 = vmul.f32 %v1030, %v1035
  %1039 = vrot.lane.b32.xlu0 %v1037, 32
  %v1040 = vpop.permute.xlu0 %1039
  %v1042 = vadd.f32 %v1032, %v1040
  %v1043 = vtanh.pop %v1042
  %1045 = vrot.lane.b32.xlu0 %v1043, 32
  %v1046 = vpop.permute.xlu0 %1045
  %v1048 = vmul.f32 %v1030, %v1046
  %v1049 = vpack.c.bf16 %v990, %v990
  %1051 = vrot.lane.b32.xlu0 %v1049, 64
  %v1052 = vpop.permute.xlu0 %1051
  %v1054 = vsel %vm142, %v1052, 0
  %1056 = vmatpush.bf16.msra.mxu0 0
  %1057 = vmatpush.bf16.msra.mxu0 0
  %1058 = vmatpush.bf16.msra.mxu0 0
  %1059 = vmatpush.bf16.msra.mxu0 0
  %1060 = vmatpush.bf16.msra.mxu0 0
  %1061 = vmatpush.bf16.msra.mxu0 0
  %1062 = vmatpush.bf16.msra.mxu0 %v264
  %1063 = vmatpush.bf16.msra.mxu0 %v263
  %1064 = vmatmul.bf16.gmra.mxu0 %v1054
  %v1065 = vpop.f32.mrf.mxu0
  %v1066 = vadd.f32 0.0, %v1065
  %v1067 = vpop.f32.mrf.mxu0
  %1068 = vdwg.mxu0
  %1069 = vmatpush.bf16.msra.mxu0 0
  %1070 = vmatpush.bf16.msra.mxu0 0
  %1071 = vmatpush.bf16.msra.mxu0 0
  %1072 = vmatpush.bf16.msra.mxu0 0
  %1073 = vmatpush.bf16.msra.mxu0 0
  %1074 = vmatpush.bf16.msra.mxu0 0
  %1075 = vmatpush.bf16.msra.mxu0 %v289
  %1076 = vmatpush.bf16.msra.mxu0 %v288
  %1077 = vmatmul.bf16.gmra.mxu0 %v996
  %v1078 = vpop.f32.mrf.mxu0
  %v1079 = vadd.f32 %v1066, %v1078
  %v1080 = vpop.f32.mrf.mxu0
  %1081 = vdwg.mxu0
  %v1082 = vadd.f32 %v1079, %v306
  %v1083 = vxor.u32 %v1082, 2147483648
  %v1084 = vmul.f32 %v1083, 1.442695
  %v1085 = vpow.pop %v1084
  %v1086 = vadd.f32 %v1085, 1.0
  %v1087 = vrcp.pop %v1086
  %v1088 = vmul.f32 %v1086, %v1087
  %v1089 = vsub.f32 1.0, %v1088
  %v1090 = vmul.f32 %v1087, %v1089
  %v1091 = vadd.f32 %v1087, %v1090
  %vm1092 = vweird.f32 %v1086
  %vm1093 = vweird.f32 %v1087
  %vm1094 = vmor %vm1092, %vm1093
  %v1095 = vsel %vm1094, %v1087, %v1091
  %v1096 = vand.u32 2147483647, %v1086
  %vm1097 = vcmp.eq.f32.partialorder %v1096, 8.507059e+37
  %v1098 = vand.u32 %v1086, 2147483648
  %v1099 = vor.u32 1.1754944e-38, %v1098
  %v1100 = vsel %vm1097, %v1099, %v1095
  %v1101 = vmul.f32 1.0, %v1100
  %v1102 = vtanh.pop %v1082
  %v1103 = vmul.f32 %v1101, %v984
  %1105 = vrot.lane.b32.xlu0 %v1102, 32
  %v1106 = vpop.permute.xlu0 %1105
  %v1108 = vmul.f32 %v1101, %v1106
  %1110 = vrot.lane.b32.xlu0 %v1108, 32
  %v1111 = vpop.permute.xlu0 %1110
  %v1113 = vadd.f32 %v1103, %v1111
  %v1114 = vtanh.pop %v1113
  %1116 = vrot.lane.b32.xlu0 %v1114, 32
  %v1117 = vpop.permute.xlu0 %1116
  %v1119 = vmul.f32 %v1101, %v1117
  %v1120 = vpack.c.bf16 %v1048, %v1048
  %v1121 = vpack.c.bf16 %v1119, %v1119
  %1123 = vrot.lane.b32.xlu0 %v1121, 64
  %v1124 = vpop.permute.xlu0 %1123
  %v1126 = vsel %vm142, %v1124, 0
  %1128 = vmatpush.bf16.msra.mxu0 0
  %1129 = vmatpush.bf16.msra.mxu0 0
  %1130 = vmatpush.bf16.msra.mxu0 0
  %1131 = vmatpush.bf16.msra.mxu0 0
  %1132 = vmatpush.bf16.msra.mxu0 0
  %1133 = vmatpush.bf16.msra.mxu0 0
  %1134 = vmatpush.bf16.msra.mxu0 %v264
  %1135 = vmatpush.bf16.msra.mxu0 %v263
  %1136 = vmatmul.bf16.gmra.mxu0 %v1126
  %v1137 = vpop.f32.mrf.mxu0
  %v1138 = vadd.f32 0.0, %v1137
  %v1139 = vpop.f32.mrf.mxu0
  %1140 = vdwg.mxu0
  %1142 = vrot.lane.b32.xlu0 %v1120, 64
  %v1143 = vpop.permute.xlu0 %1142
  %v1145 = vsel %vm142, %v1143, 0
  %1147 = vmatpush.bf16.msra.mxu0 0
  %1148 = vmatpush.bf16.msra.mxu0 0
  %1149 = vmatpush.bf16.msra.mxu0 0
  %1150 = vmatpush.bf16.msra.mxu0 0
  %1151 = vmatpush.bf16.msra.mxu0 0
  %1152 = vmatpush.bf16.msra.mxu0 0
  %1153 = vmatpush.bf16.msra.mxu0 %v289
  %1154 = vmatpush.bf16.msra.mxu0 %v288
  %1155 = vmatmul.bf16.gmra.mxu0 %v1145
  %v1156 = vpop.f32.mrf.mxu0
  %v1157 = vadd.f32 %v1138, %v1156
  %v1158 = vpop.f32.mrf.mxu0
  %1159 = vdwg.mxu0
  %v1160 = vadd.f32 %v1157, %v306
  %v1161 = vxor.u32 %v1160, 2147483648
  %v1162 = vmul.f32 %v1161, 1.442695
  %v1163 = vpow.pop %v1162
  %v1164 = vadd.f32 %v1163, 1.0
  %v1165 = vrcp.pop %v1164
  %v1166 = vmul.f32 %v1164, %v1165
  %v1167 = vsub.f32 1.0, %v1166
  %v1168 = vmul.f32 %v1165, %v1167
  %v1169 = vadd.f32 %v1165, %v1168
  %vm1170 = vweird.f32 %v1164
  %vm1171 = vweird.f32 %v1165
  %vm1172 = vmor %vm1170, %vm1171
  %v1173 = vsel %vm1172, %v1165, %v1169
  %v1174 = vand.u32 2147483647, %v1164
  %vm1175 = vcmp.eq.f32.partialorder %v1174, 8.507059e+37
  %v1176 = vand.u32 %v1164, 2147483648
  %v1177 = vor.u32 1.1754944e-38, %v1176
  %v1178 = vsel %vm1175, %v1177, %v1173
  %v1179 = vmul.f32 1.0, %v1178
  %v1180 = vtanh.pop %v1160
  %v1181 = vmul.f32 %v1179, %v1113
  %1183 = vrot.lane.b32.xlu0 %v1180, 32
  %v1184 = vpop.permute.xlu0 %1183
  %v1186 = vmul.f32 %v1179, %v1184
  %1188 = vrot.lane.b32.xlu0 %v1186, 32
  %v1189 = vpop.permute.xlu0 %1188
  %v1191 = vadd.f32 %v1181, %v1189
  %v1192 = vtanh.pop %v1191
  %1194 = vrot.lane.b32.xlu0 %v1192, 32
  %v1195 = vpop.permute.xlu0 %1194
  %v1197 = vmul.f32 %v1179, %v1195
  %v1198 = vld [vmem:[%s7] sm:$0x1]
  %v1200 = vperm.slane %v1198, 0
  %1201 = vrot.lane.b32.xlu0 %v1200, 64
  %v1202 = vpop.permute.xlu0 %1201
  %v1204 = vmul.f32 %v1197, %v1202
  %1206 = vrot.lane.b32.xlu0 %v1204, 64
  %v1207 = vpop.permute.xlu0 %1206
  %v1209 = vsel %vm142, %v1207, 0.0
  %1210 = vadd.xlane.f32.xlu0 %v1209
  %v1211 = vpop.xlane.xlu0 %1210
  %v1212 = vld [vmem:[#allocation2] sm:$0x1]
  %v1214 = vperm.slane %v1212, 0
  %v1216 = vadd.f32 %v1211, %v1214
  %v1217 = vxor.u32 %v1216, 2147483648
  %v1218 = vmul.f32 %v1217, 1.442695
  %v1219 = vpow.pop %v1218
  %v1220 = vadd.f32 %v1219, 1.0
  %v1221 = vrcp.pop %v1220
  %v1222 = vmul.f32 %v1220, %v1221
  %v1223 = vsub.f32 1.0, %v1222
  %v1224 = vmul.f32 %v1221, %v1223
  %v1225 = vadd.f32 %v1221, %v1224
  %vm1226 = vweird.f32 %v1220
  %vm1227 = vweird.f32 %v1221
  %vm1228 = vmor %vm1226, %vm1227
  %v1229 = vsel %vm1228, %v1221, %v1225
  %v1230 = vand.u32 2147483647, %v1220
  %vm1231 = vcmp.eq.f32.partialorder %v1230, 8.507059e+37
  %v1232 = vand.u32 %v1220, 2147483648
  %v1233 = vor.u32 1.1754944e-38, %v1232
  %v1234 = vsel %vm1231, %v1233, %v1229
  %v1235 = vmul.f32 1.0, %v1234
  %vm1236 = vcmask 7168
  %1237 = vst.msk [vmem:[%s9] sm:$0xff] %vm1236, %v1235
  // Predicated region
  $region38: #{lstm_forward.1} parent=0 // pred_check
    _
  $region39: #{lstm_forward.1} parent=0 // pred_check_branch
    %1239 = sbr.rel (0) target = $region41
  $region40: #{lstm_forward.1} parent=0 // pred_region
    _
  $region41: #{lstm_forward.1} parent=0 // pred_fallthru
    _
  // Predicated region
  $region42: #{lstm_forward.1} parent=0 // pred_check
    _
  $region43: #{lstm_forward.1} parent=0 // pred_check_branch
    %1241 = sbr.rel (0) target = $region45
  $region44: #{lstm_forward.1} parent=0 // pred_region
    _
  $region45: #{lstm_forward.1} parent=0 // pred_fallthru
    _

</llo_original>
